<compile_context>
chip_gen: v7x
topology: tpu7x:2x2x1
jax: 0.10.0
libtpu: 0.0.40
codegen_flags: <defaults>
</compile_context>

<pallas_src>
import functools

import jax
import jax.numpy as jnp
from jax.experimental import pallas as pl
from jax.experimental.pallas import tpu as pltpu


_VMEM_LIMIT = 48 * 1024 * 1024   # <= v7x 64 MiB/TC; > default 16/32 MiB on v5e/v6e


def _round_up(x, m):
    return ((x + m - 1) // m) * m


def _pick_queue_block(kq, want):
    """Largest multiple of 128 that divides kq and is <= want (else full kq)."""
    best = kq
    b = 128
    while b <= min(want, kq):
        if kq % b == 0:
            best = b
        b += 128
    return best


# --------------------------------------------------------------------------
# Pallas kernels
# --------------------------------------------------------------------------
def _encoder_kernel(x_ref, w0_ref, b0_ref, w1_ref, b1_ref, w2_ref, b2_ref,
                    ent_ref, inst_ref, feat_ref, acc_ref):
    """Grid: (view v, reduction tile k of in_features).

    x @ w0 is accumulated in an f32 VMEM scratch across the k axis (bf16 MXU
    inputs); all epilogue work (bias, projection head, L2-normalize) runs once
    at the last k step so the inner loop stays MXU/DMA-bound.
    """
    k = pl.program_id(1)

    @pl.when(k == 0)
    def _init():
        acc_ref[...] = jnp.zeros_like(acc_ref)

    # backbone stand-in: flattened image -> dim_mlp features (K-tiled matmul)
    acc_ref[...] += jnp.dot(x_ref[...], w0_ref[...],
                            preferred_element_type=jnp.float32)

    @pl.when(k == pl.num_programs(1) - 1)
    def _finalize():
        cdt = w1_ref.dtype                       # bf16 params -> bf16 MXU matmuls
        h0 = acc_ref[...] + b0_ref[...]          # biases stay f32
        ent_ref[...] = h0.astype(ent_ref.dtype)  # hook: 'entangled_emb'

        # fc = Sequential(Linear(dim_mlp, dim_mlp), ReLU, Linear(dim_mlp, dim))
        h1 = jnp.maximum(
            jnp.dot(h0.astype(cdt), w1_ref[...],
                    preferred_element_type=jnp.float32) + b1_ref[...], 0.0)
        out = (jnp.dot(h1.astype(cdt), w2_ref[...],
                       preferred_element_type=jnp.float32) + b2_ref[...])
        inst_ref[...] = out.astype(inst_ref.dtype)   # hook: 'inst_emb'

        # F.normalize(out, dim=1), eps=1e-12 == out * rsqrt(max(||out||^2, eps^2))
        sq = jnp.sum(out * out, axis=1, keepdims=True)
        feat_ref[...] = out * jax.lax.rsqrt(jnp.maximum(sq, 1e-24))


def _moco_lneg_kernel(q_ref, queue_ref, lneg_ref, m_ref, s_ref, *, inv_t):
    """Grid over queue column-blocks (queue stored [dim, K] - natural MXU RHS).

    Emits lane-dense l_neg (compute dtype) plus per-block f32 logsumexp
    partials (max, sum-exp) so the grid axis can be 'parallel' (megacore).
    """
    z = jnp.dot(q_ref[...], queue_ref[...],
                preferred_element_type=jnp.float32) * inv_t      # [N, bq] f32
    lneg_ref[...] = z.astype(lneg_ref.dtype)                     # bf16 writeback
    m = jnp.max(z, axis=1, keepdims=True)
    m_ref[...] = m
    s_ref[...] = jnp.sum(jnp.exp(z - m), axis=1, keepdims=True)


def _momentum_kernel(*refs, m, n_params):
    """param_k = m * param_k + (1 - m) * param_q  (key half only, fused).

    Inputs are the stacked [2, ...] parameters (row 0 = query, row 1 = key).
    w0 (the large parameter) is row-tiled over the grid; the small head
    params use constant-index (resident) blocks, recomputed idempotently each
    step.  Output BlockSpecs cover only the key row; with
    input_output_aliases the query row keeps its existing HBM contents.
    """
    in_refs = refs[:n_params]
    out_refs = refs[n_params:]
    for p_ref, o_ref in zip(in_refs, out_refs):
        pq = p_ref[0].astype(jnp.float32)
        pk = p_ref[1].astype(jnp.float32)
        o_ref[...] = (pk * m + pq * (1.0 - m)).astype(o_ref.dtype)


def _enqueue_kernel(keys_ref, ptr_ref, queue_in_ref, queue_out_ref, sem):
    """queue[:, ptr:ptr+N] = keys.T  (queue stays in HBM; only new columns move)."""
    del queue_in_ref                       # aliased to queue_out_ref (same buffer)
    n = keys_ref.shape[1]
    cp = pltpu.make_async_copy(
        keys_ref, queue_out_ref.at[:, pl.ds(ptr_ref[0], n)], sem)
    cp.start()
    cp.wait()


# --------------------------------------------------------------------------
# Wrappers (glue)
# --------------------------------------------------------------------------
def encoder_forward(x_stacked, params, *, k_tile=1024):
    """Both encoder passes (query view 0 / key view 1) in ONE pallas_call.

    Returns stacked (entangled_emb [2,N,dim_mlp], inst_emb [2,N,dim],
    normalized features [2,N,dim] (f32)).
    """
    w0, b0, w1, b1, w2, b2 = params
    nviews, n, f = x_stacked.shape
    f_pad = w0.shape[1]
    dm = w0.shape[2]
    d = w2.shape[2]
    cdt = w1.dtype

    tk = min(k_tile, f_pad)
    if f_pad % tk:
        tk = f_pad
    if f != f_pad:          # zero-pad the reduction axis (exact: padded w0 rows are 0)
        x_stacked = jnp.pad(x_stacked, ((0, 0), (0, 0), (0, f_pad - f)))
    grid = (nviews, f_pad // tk)

    out_shape = (
        jax.ShapeDtypeStruct((nviews, n, dm), cdt),          # entangled_emb
        jax.ShapeDtypeStruct((nviews, n, d), cdt),           # inst_emb
        jax.ShapeDtypeStruct((nviews, n, d), jnp.float32),   # normalized features
    )
    return pl.pallas_call(
        _encoder_kernel,
        grid_spec=pltpu.PrefetchScalarGridSpec(
            num_scalar_prefetch=0,
            grid=grid,
            in_specs=[
                pl.BlockSpec((None, n, tk), lambda v, k: (v, 0, k)),    # x
                pl.BlockSpec((None, tk, dm), lambda v, k: (v, k, 0)),   # w0
                pl.BlockSpec((None, 1, dm), lambda v, k: (v, 0, 0)),    # b0 (f32)
                pl.BlockSpec((None, dm, dm), lambda v, k: (v, 0, 0)),   # w1
                pl.BlockSpec((None, 1, dm), lambda v, k: (v, 0, 0)),    # b1 (f32)
                pl.BlockSpec((None, dm, d), lambda v, k: (v, 0, 0)),    # w2
                pl.BlockSpec((None, 1, d), lambda v, k: (v, 0, 0)),     # b2 (f32)
            ],
            out_specs=(
                pl.BlockSpec((None, n, dm), lambda v, k: (v, 0, 0)),
                pl.BlockSpec((None, n, d), lambda v, k: (v, 0, 0)),
                pl.BlockSpec((None, n, d), lambda v, k: (v, 0, 0)),
            ),
            scratch_shapes=[pltpu.VMEM((n, dm), jnp.float32)],
        ),
        out_shape=out_shape,
        compiler_params=pltpu.CompilerParams(
            dimension_semantics=("parallel", "arbitrary"),
            vmem_limit_bytes=_VMEM_LIMIT),
    )(x_stacked, w0, b0, w1, b1, w2, b2)


def moco_logits_and_loss(q, k, queue, temperature, *, queue_block=4096):
    """logits [N, K+1] (col 0 = l_pos) and InfoNCE loss with targets == 0.

    queue is stored [dim, K].  The kernel streams queue column-blocks
    ('parallel' grid axis -> splits across v7x's 2 TCs) and emits bf16 l_neg
    plus per-block f32 logsumexp partials; the tiny combine runs outside.
    """
    n, dim = q.shape
    kq = queue.shape[1]
    bq = _pick_queue_block(kq, queue_block)
    nb = kq // bq
    inv_t = 1.0 / float(temperature)
    cdt = queue.dtype

    kern = functools.partial(_moco_lneg_kernel, inv_t=inv_t)
    lneg, m_part, s_part = pl.pallas_call(
        kern,
        grid_spec=pltpu.PrefetchScalarGridSpec(
            num_scalar_prefetch=0,
            grid=(nb,),
            in_specs=[
                pl.BlockSpec((n, dim), lambda j: (0, 0)),      # q (resident, bf16)
                pl.BlockSpec((dim, bq), lambda j: (0, j)),     # queue column-block
            ],
            out_specs=(
                pl.BlockSpec((n, bq), lambda j: (0, j)),         # l_neg / T (lane-dense)
                pl.BlockSpec((None, n, 1), lambda j: (j, 0, 0)), # per-block max
                pl.BlockSpec((None, n, 1), lambda j: (j, 0, 0)), # per-block sum-exp
            ),
        ),
        out_shape=(
            jax.ShapeDtypeStruct((n, kq), cdt),
            jax.ShapeDtypeStruct((nb, n, 1), jnp.float32),
            jax.ShapeDtypeStruct((nb, n, 1), jnp.float32),
        ),
        compiler_params=pltpu.CompilerParams(
            dimension_semantics=("parallel",),
            vmem_limit_bytes=_VMEM_LIMIT),
    )(q.astype(cdt), queue)

    # l_pos (einsum 'nc,nc->n') is a trivial [N, dim] reduce - computed once in f32.
    lpos = jnp.sum(q.astype(jnp.float32) * k.astype(jnp.float32),
                   axis=1, keepdims=True) * inv_t
    # F.cross_entropy(logits, 0) = mean_n( logsumexp(logits_n) - l_pos_n / T )
    blk_lse = (m_part + jnp.log(s_part))[..., 0].T            # [N, nb] f32
    lse = jax.nn.logsumexp(jnp.concatenate([lpos, blk_lse], axis=1), axis=1)
    loss = jnp.mean(lse - lpos[:, 0])
    logits = jnp.concatenate([lpos.astype(cdt), lneg], axis=1)
    return logits, loss


def momentum_update(params, m, *, row_tile=1024):
    """Single fused, row-tiled kernel; key row of every stacked param updated in place."""
    n_params = len(params)
    kern = functools.partial(_momentum_kernel, m=float(m), n_params=n_params)

    w0 = params[0]                      # [2, f_pad, dm] - the large parameter
    rows = w0.shape[1]
    rt = min(row_tile, rows)
    if rows % rt:
        rt = rows
    grid = (rows // rt,)

    in_specs = [pl.BlockSpec((2, rt) + tuple(w0.shape[2:]),
                             lambda i: (0, i, 0))]
    out_specs = [pl.BlockSpec((None, rt) + tuple(w0.shape[2:]),
                              lambda i: (1, i, 0))]
    for p in params[1:]:
        nd = p.ndim
        in_specs.append(pl.BlockSpec(tuple(p.shape),
                                     lambda i, nd=nd: (0,) * nd))
        out_specs.append(pl.BlockSpec((None,) + tuple(p.shape[1:]),
                                      lambda i, nd=nd: (1,) + (0,) * (nd - 1)))

    out_shape = tuple(jax.ShapeDtypeStruct(p.shape, p.dtype) for p in params)
    new_params = pl.pallas_call(
        kern,
        grid_spec=pltpu.PrefetchScalarGridSpec(
            num_scalar_prefetch=0,
            grid=grid,
            in_specs=in_specs,
            out_specs=tuple(out_specs),
        ),
        out_shape=out_shape,
        input_output_aliases={i: i for i in range(n_params)},
        compiler_params=pltpu.CompilerParams(
            dimension_semantics=("arbitrary",),
            vmem_limit_bytes=_VMEM_LIMIT),
    )(*params)
    return tuple(new_params)


def dequeue_and_enqueue(queue, queue_ptr, keys):
    """queue[:, ptr:ptr+N] = keys.T ; ptr = (ptr + N) % K   (in-place via aliasing)."""
    n = keys.shape[0]
    kq = queue.shape[1]
    assert kq % n == 0  # matches the PyTorch assert; the DMA does not wrap around
    ptr = jnp.asarray([queue_ptr], dtype=jnp.int32)
    keys_t = keys.T.astype(queue.dtype)            # [dim, N] column block
    new_queue = pl.pallas_call(
        _enqueue_kernel,
        in_specs=[
            pl.BlockSpec(memory_space=pltpu.MemorySpace.VMEM),   # keys.T
            pl.BlockSpec(memory_space=pltpu.MemorySpace.SMEM),   # ptr
            pl.BlockSpec(memory_space=pl.ANY),                   # queue (HBM)
        ],
        out_specs=pl.BlockSpec(memory_space=pl.ANY),             # queue (aliased)
        out_shape=jax.ShapeDtypeStruct(queue.shape, queue.dtype),
        scratch_shapes=[pltpu.SemaphoreType.DMA(())],
        input_output_aliases={2: 0},
    )(keys_t, ptr, queue)
    return new_queue, (queue_ptr + n) % kq


# --------------------------------------------------------------------------
class MomentumContrastPallas:
    """Pallas re-implementation of the MoCo v2 forward pass (single device)."""

    def __init__(self, in_features, dim_mlp=256, dim=128, queue_length=512,
                 m=0.999, T=0.2, seed=0, param_dtype=jnp.bfloat16,
                 k_tile=1024, queue_block=4096):
        assert k_tile % 128 == 0, "k_tile must be a multiple of 128 lanes"
        self.m = float(m)
        self.T = float(T)
        self.queue_length = int(queue_length)
        self.queue_block = int(queue_block)
        self.compute_dtype = param_dtype
        self.in_features = int(in_features)

        # Pad the flattened-image axis to a multiple of the k tile so the
        # reduction never collapses to one huge (non-VMEM-fitting) block.
        self.tk = min(int(k_tile), _round_up(self.in_features, 128))
        self.f_pad = _round_up(self.in_features, self.tk)

        key = jax.random.PRNGKey(seed)
        k0, k1, k2, kq = jax.random.split(key, 4)
        w0 = jnp.zeros((self.f_pad, dim_mlp), jnp.float32)
        w0 = w0.at[:self.in_features].set(
            0.02 * jax.random.normal(k0, (self.in_features, dim_mlp)))
        w1 = 0.02 * jax.random.normal(k1, (dim_mlp, dim_mlp))
        w2 = 0.02 * jax.random.normal(k2, (dim_mlp, dim))
        w0, w1, w2 = (w.astype(param_dtype) for w in (w0, w1, w2))
        b0 = jnp.zeros((1, dim_mlp), jnp.float32)   # biases / epilogue stay f32
        b1 = jnp.zeros((1, dim_mlp), jnp.float32)
        b2 = jnp.zeros((1, dim), jnp.float32)
        # key encoder starts as an exact copy of the query encoder:
        # stack -> [2, ...] with row 0 = query params, row 1 = key params.
        self.params = tuple(jnp.stack([p, p], axis=0)
                            for p in (w0, b0, w1, b1, w2, b2))

        # queue: [dim, K] (torch layout; K on lanes -> natural MXU RHS),
        # columns L2-normalized == F.normalize(torch.randn(dim, K), dim=0).
        queue = jax.random.normal(kq, (dim, self.queue_length), dtype=jnp.float32)
        sq = jnp.sum(queue * queue, axis=0, keepdims=True)
        queue = queue * jax.lax.rsqrt(jnp.maximum(sq, 1e-24))
        self.queue = queue.astype(param_dtype)
        self.queue_ptr = 0

    def forward(self, images):
        im_q, im_k = images[0], images[1]
        n = im_q.shape[0]
        cdt = self.compute_dtype
        # stack the two global views: [2, N, C*H*W] in the compute dtype (bf16)
        x = jnp.stack([im_q.reshape(n, -1), im_k.reshape(n, -1)],
                      axis=0).astype(cdt)

        # 1) momentum update of the key encoder (fused, row-tiled, in-place).
        #    (In PyTorch this runs after encoder_q / before encoder_k; since it
        #    only touches key params the result is identical.)
        self.params = momentum_update(self.params, self.m, row_tile=self.tk)

        # 2) query + key encoder passes fused in one pallas_call.
        ent, inst, feat = encoder_forward(x, self.params, k_tile=self.tk)
        q = feat[0]
        k = jax.lax.stop_gradient(feat[1])   # encoder_k runs under no_grad

        # 3) contrastive logits + InfoNCE loss (queue-tiled, 'parallel' axis).
        logits, loss = moco_logits_and_loss(q, k, self.queue, self.T,
                                            queue_block=self.queue_block)
        targets = jnp.zeros((n,), dtype=jnp.int32)

        # 4) enqueue the new keys in place (aliased queue buffer, column DMA).
        self.queue, self.queue_ptr = dequeue_and_enqueue(
            self.queue, self.queue_ptr, k)

        return dict(
            loss=loss,
            logits=logits,
            local_logits=None,
            targets=targets,
            local_targets=None,
            embeddings=dict(entangled_emb=ent[0], inst_emb=inst[0]),
        )


# --------------------------------------------------------------------------
if __name__ == "__main__":
    # Small but hardware-aligned shapes: N multiple of 8 (f32 sublanes),
    # feature dims multiples of 128 lanes, in_features = 768 (6 x 128).
    N, C, H, W = 8, 3, 16, 16
    DIM_MLP, DIM, QUEUE_LEN = 256, 128, 512

    key = jax.random.PRNGKey(0)
    kq_img, kk_img = jax.random.split(key)
    im_q = jax.random.normal(kq_img, (N, C, H, W), dtype=jnp.float32)
    im_k = jax.random.normal(kk_img, (N, C, H, W), dtype=jnp.float32)

    model = MomentumContrastPallas(
        in_features=C * H * W, dim_mlp=DIM_MLP, dim=DIM,
        queue_length=QUEUE_LEN, m=0.999, T=0.2, seed=0,
        param_dtype=jnp.bfloat16,     # bf16 MXU data path, f32 accumulation
        k_tile=256, queue_block=256)  # small tiles so the demo exercises the grids

    # snapshots for correctness checks (separate buffers; originals get donated
    # by the aliased in-place kernels)
    w0_q_before = jnp.copy(model.params[0][0])
    queue_before = jnp.copy(model.queue)

    out = model.forward([im_q, im_k])

    jax.block_until_ready(out["loss"])
    jax.block_until_ready(out["logits"])
    jax.block_until_ready(out["embeddings"]["entangled_emb"])
    jax.block_until_ready(model.queue)

    # ---- shape / sanity checks -------------------------------------------
    assert out["logits"].shape == (N, QUEUE_LEN + 1)
    assert out["targets"].shape == (N,)
    assert out["loss"].shape == ()
    assert out["embeddings"]["entangled_emb"].shape == (N, DIM_MLP)
    assert out["embeddings"]["inst_emb"].shape == (N, DIM)
    assert bool(jnp.isfinite(out["loss"]))
    assert model.queue_ptr == N

    # ---- numerical reference (pure JAX f32, emulating the kernel's bf16 casts)
    hp = jax.lax.Precision.HIGHEST
    cdt = model.compute_dtype

    def as_c(x):   # the cast applied on the MXU data path inside the kernels
        return x.astype(cdt).astype(jnp.float32)

    w0, b0, w1, b1, w2, b2 = [p.astype(jnp.float32) for p in model.params]

    def ref_encoder(xf, v):
        h0 = jnp.dot(as_c(xf), w0[v, :xf.shape[1]], precision=hp) + b0[v]
        h1 = jnp.maximum(jnp.dot(as_c(h0), w1[v], precision=hp) + b1[v], 0.0)
        o = jnp.dot(as_c(h1), w2[v], precision=hp) + b2[v]
        return o / jnp.maximum(
            jnp.sqrt(jnp.sum(o * o, axis=1, keepdims=True)), 1e-12)

    xq = im_q.reshape(N, -1)
    xk = im_k.reshape(N, -1)
    q_r = ref_encoder(xq, 0)
    k_r = ref_encoder(xk, 1)
    l_pos = jnp.sum(q_r * k_r, axis=1, keepdims=True)
    l_neg = jnp.dot(as_c(q_r), queue_before.astype(jnp.float32), precision=hp)
    ref_logits = jnp.concatenate([l_pos, l_neg], axis=1) / model.T
    ref_loss = jnp.mean(jax.nn.logsumexp(ref_logits, axis=1) - ref_logits[:, 0])

    assert bool(jnp.allclose(out["logits"].astype(jnp.float32), ref_logits,
                             rtol=5e-2, atol=5e-2))
    assert bool(jnp.allclose(out["loss"], ref_loss, rtol=5e-2, atol=5e-2))
    # momentum update: query params untouched; key params == query (they were equal)
    assert bool(jnp.allclose(model.params[0][0], w0_q_before))
    assert bool(jnp.allclose(model.params[0][1].astype(jnp.float32),
                             w0_q_before.astype(jnp.float32),
                             rtol=1e-2, atol=1e-3))
    # enqueue: new keys written at columns [0, N), remaining columns untouched
    assert bool(jnp.allclose(model.queue[:, :N].T.astype(jnp.float32), k_r,
                             rtol=5e-2, atol=5e-2))
    assert bool(jnp.allclose(model.queue[:, N:], queue_before[:, N:]))

    print("KERNEL_OK")
</pallas_src>

<mosaic_0001>
module attributes {stable_mosaic.version = 11 : i64} {
  func.func @_momentum_kernel(%arg0: i32, %arg1: memref<2x256x256xbf16, #tpu.memory_space<vmem>>, %arg2: memref<2x1x256xf32, #tpu.memory_space<vmem>>, %arg3: memref<2x256x256xbf16, #tpu.memory_space<vmem>>, %arg4: memref<2x1x256xf32, #tpu.memory_space<vmem>>, %arg5: memref<2x256x128xbf16, #tpu.memory_space<vmem>>, %arg6: memref<2x1x128xf32, #tpu.memory_space<vmem>>, %arg7: memref<1x256x256xbf16, #tpu.memory_space<vmem>>, %arg8: memref<1x1x256xf32, #tpu.memory_space<vmem>>, %arg9: memref<1x256x256xbf16, #tpu.memory_space<vmem>>, %arg10: memref<1x1x256xf32, #tpu.memory_space<vmem>>, %arg11: memref<1x256x128xbf16, #tpu.memory_space<vmem>>, %arg12: memref<1x1x128xf32, #tpu.memory_space<vmem>>) attributes {dimension_semantics = [#tpu.dimension_semantics<arbitrary>], iteration_bounds = array<i64: 3>, scalar_prefetch = 0 : i64, scratch_operands = 0 : i64, tpu.core_type = #tpu.core_type<tc>, window_params = [{transform_indices = @transform_0, window_bounds = array<i64: 2, 256, 256>}, {pipeline_mode = #tpu.pipeline_mode<synchronous>, transform_indices = @transform_1, window_bounds = array<i64: 2, 1, 256>}, {pipeline_mode = #tpu.pipeline_mode<synchronous>, transform_indices = @transform_2, window_bounds = array<i64: 2, 256, 256>}, {pipeline_mode = #tpu.pipeline_mode<synchronous>, transform_indices = @transform_3, window_bounds = array<i64: 2, 1, 256>}, {pipeline_mode = #tpu.pipeline_mode<synchronous>, transform_indices = @transform_4, window_bounds = array<i64: 2, 256, 128>}, {pipeline_mode = #tpu.pipeline_mode<synchronous>, transform_indices = @transform_5, window_bounds = array<i64: 2, 1, 128>}, {transform_indices = @transform_6, window_bounds = array<i64: 1, 256, 256>}, {transform_indices = @transform_7, window_bounds = array<i64: 1, 1, 256>}, {transform_indices = @transform_8, window_bounds = array<i64: 1, 256, 256>}, {transform_indices = @transform_9, window_bounds = array<i64: 1, 1, 256>}, {transform_indices = @transform_10, window_bounds = array<i64: 1, 256, 128>}, {transform_indices = @transform_11, window_bounds = array<i64: 1, 1, 128>}]} {
    %c0 = arith.constant 0 : index
    %c0_0 = arith.constant 0 : index
    %c0_1 = arith.constant 0 : index
    %0 = vector.load %arg1[%c0, %c0_0, %c0_1] : memref<2x256x256xbf16, #tpu.memory_space<vmem>>, vector<1x256x256xbf16>
    %1 = vector.shape_cast %0 : vector<1x256x256xbf16> to vector<256x256xbf16>
    %2 = arith.extf %1 : vector<256x256xbf16> to vector<256x256xf32>
    %c1 = arith.constant 1 : index
    %c0_2 = arith.constant 0 : index
    %c0_3 = arith.constant 0 : index
    %3 = vector.load %arg1[%c1, %c0_2, %c0_3] : memref<2x256x256xbf16, #tpu.memory_space<vmem>>, vector<1x256x256xbf16>
    %4 = vector.shape_cast %3 : vector<1x256x256xbf16> to vector<256x256xbf16>
    %5 = arith.extf %4 : vector<256x256xbf16> to vector<256x256xf32>
    %cst = arith.constant 9.990000e-01 : f32
    %6 = vector.broadcast %cst : f32 to vector<256x256xf32>
    %7 = arith.mulf %5, %6 : vector<256x256xf32>
    %cst_4 = arith.constant 1.000000e-03 : f32
    %8 = vector.broadcast %cst_4 : f32 to vector<256x256xf32>
    %9 = arith.mulf %2, %8 : vector<256x256xf32>
    %10 = arith.addf %7, %9 : vector<256x256xf32>
    %11 = arith.truncf %10 : vector<256x256xf32> to vector<256x256xbf16>
    %c0_5 = arith.constant 0 : index
    %c0_6 = arith.constant 0 : index
    %c0_7 = arith.constant 0 : index
    %12 = vector.load %arg7[%c0_5, %c0_6, %c0_7] : memref<1x256x256xbf16, #tpu.memory_space<vmem>>, vector<1x256x256xbf16>
    %13 = vector.shape_cast %12 : vector<1x256x256xbf16> to vector<256x256xbf16>
    %14 = vector.shape_cast %11 : vector<256x256xbf16> to vector<1x256x256xbf16>
    tpu.vector_store %arg7[%c0_5, %c0_6, %c0_7], %14 {strides = array<i32>} : memref<1x256x256xbf16, #tpu.memory_space<vmem>>, vector<1x256x256xbf16>,
    %c0_8 = arith.constant 0 : index
    %c0_9 = arith.constant 0 : index
    %c0_10 = arith.constant 0 : index
    %15 = vector.load %arg2[%c0_8, %c0_9, %c0_10] : memref<2x1x256xf32, #tpu.memory_space<vmem>>, vector<1x1x256xf32>
    %16 = vector.shape_cast %15 : vector<1x1x256xf32> to vector<1x256xf32>
    %c1_11 = arith.constant 1 : index
    %c0_12 = arith.constant 0 : index
    %c0_13 = arith.constant 0 : index
    %17 = vector.load %arg2[%c1_11, %c0_12, %c0_13] : memref<2x1x256xf32, #tpu.memory_space<vmem>>, vector<1x1x256xf32>
    %18 = vector.shape_cast %17 : vector<1x1x256xf32> to vector<1x256xf32>
    %cst_14 = arith.constant 9.990000e-01 : f32
    %19 = vector.broadcast %cst_14 : f32 to vector<1x256xf32>
    %20 = arith.mulf %18, %19 : vector<1x256xf32>
    %cst_15 = arith.constant 1.000000e-03 : f32
    %21 = vector.broadcast %cst_15 : f32 to vector<1x256xf32>
    %22 = arith.mulf %16, %21 : vector<1x256xf32>
    %23 = arith.addf %20, %22 : vector<1x256xf32>
    %c0_16 = arith.constant 0 : index
    %c0_17 = arith.constant 0 : index
    %c0_18 = arith.constant 0 : index
    %24 = vector.load %arg8[%c0_16, %c0_17, %c0_18] : memref<1x1x256xf32, #tpu.memory_space<vmem>>, vector<1x1x256xf32>
    %25 = vector.shape_cast %24 : vector<1x1x256xf32> to vector<1x256xf32>
    %26 = vector.shape_cast %23 : vector<1x256xf32> to vector<1x1x256xf32>
    tpu.vector_store %arg8[%c0_16, %c0_17, %c0_18], %26 {strides = array<i32>} : memref<1x1x256xf32, #tpu.memory_space<vmem>>, vector<1x1x256xf32>,
    %c0_19 = arith.constant 0 : index
    %c0_20 = arith.constant 0 : index
    %c0_21 = arith.constant 0 : index
    %27 = vector.load %arg3[%c0_19, %c0_20, %c0_21] : memref<2x256x256xbf16, #tpu.memory_space<vmem>>, vector<1x256x256xbf16>
    %28 = vector.shape_cast %27 : vector<1x256x256xbf16> to vector<256x256xbf16>
    %29 = arith.extf %28 : vector<256x256xbf16> to vector<256x256xf32>
    %c1_22 = arith.constant 1 : index
    %c0_23 = arith.constant 0 : index
    %c0_24 = arith.constant 0 : index
    %30 = vector.load %arg3[%c1_22, %c0_23, %c0_24] : memref<2x256x256xbf16, #tpu.memory_space<vmem>>, vector<1x256x256xbf16>
    %31 = vector.shape_cast %30 : vector<1x256x256xbf16> to vector<256x256xbf16>
    %32 = arith.extf %31 : vector<256x256xbf16> to vector<256x256xf32>
    %cst_25 = arith.constant 9.990000e-01 : f32
    %33 = vector.broadcast %cst_25 : f32 to vector<256x256xf32>
    %34 = arith.mulf %32, %33 : vector<256x256xf32>
    %cst_26 = arith.constant 1.000000e-03 : f32
    %35 = vector.broadcast %cst_26 : f32 to vector<256x256xf32>
    %36 = arith.mulf %29, %35 : vector<256x256xf32>
    %37 = arith.addf %34, %36 : vector<256x256xf32>
    %38 = arith.truncf %37 : vector<256x256xf32> to vector<256x256xbf16>
    %c0_27 = arith.constant 0 : index
    %c0_28 = arith.constant 0 : index
    %c0_29 = arith.constant 0 : index
    %39 = vector.load %arg9[%c0_27, %c0_28, %c0_29] : memref<1x256x256xbf16, #tpu.memory_space<vmem>>, vector<1x256x256xbf16>
    %40 = vector.shape_cast %39 : vector<1x256x256xbf16> to vector<256x256xbf16>
    %41 = vector.shape_cast %38 : vector<256x256xbf16> to vector<1x256x256xbf16>
    tpu.vector_store %arg9[%c0_27, %c0_28, %c0_29], %41 {strides = array<i32>} : memref<1x256x256xbf16, #tpu.memory_space<vmem>>, vector<1x256x256xbf16>,
    %c0_30 = arith.constant 0 : index
    %c0_31 = arith.constant 0 : index
    %c0_32 = arith.constant 0 : index
    %42 = vector.load %arg4[%c0_30, %c0_31, %c0_32] : memref<2x1x256xf32, #tpu.memory_space<vmem>>, vector<1x1x256xf32>
    %43 = vector.shape_cast %42 : vector<1x1x256xf32> to vector<1x256xf32>
    %c1_33 = arith.constant 1 : index
    %c0_34 = arith.constant 0 : index
    %c0_35 = arith.constant 0 : index
    %44 = vector.load %arg4[%c1_33, %c0_34, %c0_35] : memref<2x1x256xf32, #tpu.memory_space<vmem>>, vector<1x1x256xf32>
    %45 = vector.shape_cast %44 : vector<1x1x256xf32> to vector<1x256xf32>
    %cst_36 = arith.constant 9.990000e-01 : f32
    %46 = vector.broadcast %cst_36 : f32 to vector<1x256xf32>
    %47 = arith.mulf %45, %46 : vector<1x256xf32>
    %cst_37 = arith.constant 1.000000e-03 : f32
    %48 = vector.broadcast %cst_37 : f32 to vector<1x256xf32>
    %49 = arith.mulf %43, %48 : vector<1x256xf32>
    %50 = arith.addf %47, %49 : vector<1x256xf32>
    %c0_38 = arith.constant 0 : index
    %c0_39 = arith.constant 0 : index
    %c0_40 = arith.constant 0 : index
    %51 = vector.load %arg10[%c0_38, %c0_39, %c0_40] : memref<1x1x256xf32, #tpu.memory_space<vmem>>, vector<1x1x256xf32>
    %52 = vector.shape_cast %51 : vector<1x1x256xf32> to vector<1x256xf32>
    %53 = vector.shape_cast %50 : vector<1x256xf32> to vector<1x1x256xf32>
    tpu.vector_store %arg10[%c0_38, %c0_39, %c0_40], %53 {strides = array<i32>} : memref<1x1x256xf32, #tpu.memory_space<vmem>>, vector<1x1x256xf32>,
    %c0_41 = arith.constant 0 : index
    %c0_42 = arith.constant 0 : index
    %c0_43 = arith.constant 0 : index
    %54 = vector.load %arg5[%c0_41, %c0_42, %c0_43] : memref<2x256x128xbf16, #tpu.memory_space<vmem>>, vector<1x256x128xbf16>
    %55 = vector.shape_cast %54 : vector<1x256x128xbf16> to vector<256x128xbf16>
    %56 = arith.extf %55 : vector<256x128xbf16> to vector<256x128xf32>
    %c1_44 = arith.constant 1 : index
    %c0_45 = arith.constant 0 : index
    %c0_46 = arith.constant 0 : index
    %57 = vector.load %arg5[%c1_44, %c0_45, %c0_46] : memref<2x256x128xbf16, #tpu.memory_space<vmem>>, vector<1x256x128xbf16>
    %58 = vector.shape_cast %57 : vector<1x256x128xbf16> to vector<256x128xbf16>
    %59 = arith.extf %58 : vector<256x128xbf16> to vector<256x128xf32>
    %cst_47 = arith.constant 9.990000e-01 : f32
    %60 = vector.broadcast %cst_47 : f32 to vector<256x128xf32>
    %61 = arith.mulf %59, %60 : vector<256x128xf32>
    %cst_48 = arith.constant 1.000000e-03 : f32
    %62 = vector.broadcast %cst_48 : f32 to vector<256x128xf32>
    %63 = arith.mulf %56, %62 : vector<256x128xf32>
    %64 = arith.addf %61, %63 : vector<256x128xf32>
    %65 = arith.truncf %64 : vector<256x128xf32> to vector<256x128xbf16>
    %c0_49 = arith.constant 0 : index
    %c0_50 = arith.constant 0 : index
    %c0_51 = arith.constant 0 : index
    %66 = vector.load %arg11[%c0_49, %c0_50, %c0_51] : memref<1x256x128xbf16, #tpu.memory_space<vmem>>, vector<1x256x128xbf16>
    %67 = vector.shape_cast %66 : vector<1x256x128xbf16> to vector<256x128xbf16>
    %68 = vector.shape_cast %65 : vector<256x128xbf16> to vector<1x256x128xbf16>
    tpu.vector_store %arg11[%c0_49, %c0_50, %c0_51], %68 {strides = array<i32>} : memref<1x256x128xbf16, #tpu.memory_space<vmem>>, vector<1x256x128xbf16>,
    %c0_52 = arith.constant 0 : index
    %c0_53 = arith.constant 0 : index
    %c0_54 = arith.constant 0 : index
    %69 = vector.load %arg6[%c0_52, %c0_53, %c0_54] : memref<2x1x128xf32, #tpu.memory_space<vmem>>, vector<1x1x128xf32>
    %70 = vector.shape_cast %69 : vector<1x1x128xf32> to vector<1x128xf32>
    %c1_55 = arith.constant 1 : index
    %c0_56 = arith.constant 0 : index
    %c0_57 = arith.constant 0 : index
    %71 = vector.load %arg6[%c1_55, %c0_56, %c0_57] : memref<2x1x128xf32, #tpu.memory_space<vmem>>, vector<1x1x128xf32>
    %72 = vector.shape_cast %71 : vector<1x1x128xf32> to vector<1x128xf32>
    %cst_58 = arith.constant 9.990000e-01 : f32
    %73 = vector.broadcast %cst_58 : f32 to vector<1x128xf32>
    %74 = arith.mulf %72, %73 : vector<1x128xf32>
    %cst_59 = arith.constant 1.000000e-03 : f32
    %75 = vector.broadcast %cst_59 : f32 to vector<1x128xf32>
    %76 = arith.mulf %70, %75 : vector<1x128xf32>
    %77 = arith.addf %74, %76 : vector<1x128xf32>
    %c0_60 = arith.constant 0 : index
    %c0_61 = arith.constant 0 : index
    %c0_62 = arith.constant 0 : index
    %78 = vector.load %arg12[%c0_60, %c0_61, %c0_62] : memref<1x1x128xf32, #tpu.memory_space<vmem>>, vector<1x1x128xf32>
    %79 = vector.shape_cast %78 : vector<1x1x128xf32> to vector<1x128xf32>
    %80 = vector.shape_cast %77 : vector<1x128xf32> to vector<1x1x128xf32>
    tpu.vector_store %arg12[%c0_60, %c0_61, %c0_62], %80 {strides = array<i32>} : memref<1x1x128xf32, #tpu.memory_space<vmem>>, vector<1x1x128xf32>,
    return
  }
  func.func @transform_0(%arg0: i32) -> (i32, i32, i32) {
    %c0_i32 = arith.constant 0 : i32
    %c0_i32_0 = arith.constant 0 : i32
    %c0_i32_1 = arith.constant 0 : i32
    return %c0_i32, %arg0, %c0_i32_0 : i32, i32, i32
  }
  func.func @transform_1(%arg0: i32) -> (i32, i32, i32) {
    %c0_i32 = arith.constant 0 : i32
    %c0_i32_0 = arith.constant 0 : i32
    %c0_i32_1 = arith.constant 0 : i32
    %c0_i32_2 = arith.constant 0 : i32
    return %c0_i32, %c0_i32_0, %c0_i32_1 : i32, i32, i32
  }
  func.func @transform_2(%arg0: i32) -> (i32, i32, i32) {
    %c0_i32 = arith.constant 0 : i32
    %c0_i32_0 = arith.constant 0 : i32
    %c0_i32_1 = arith.constant 0 : i32
    %c0_i32_2 = arith.constant 0 : i32
    return %c0_i32, %c0_i32_0, %c0_i32_1 : i32, i32, i32
  }
  func.func @transform_3(%arg0: i32) -> (i32, i32, i32) {
    %c0_i32 = arith.constant 0 : i32
    %c0_i32_0 = arith.constant 0 : i32
    %c0_i32_1 = arith.constant 0 : i32
    %c0_i32_2 = arith.constant 0 : i32
    return %c0_i32, %c0_i32_0, %c0_i32_1 : i32, i32, i32
  }
  func.func @transform_4(%arg0: i32) -> (i32, i32, i32) {
    %c0_i32 = arith.constant 0 : i32
    %c0_i32_0 = arith.constant 0 : i32
    %c0_i32_1 = arith.constant 0 : i32
    %c0_i32_2 = arith.constant 0 : i32
    return %c0_i32, %c0_i32_0, %c0_i32_1 : i32, i32, i32
  }
  func.func @transform_5(%arg0: i32) -> (i32, i32, i32) {
    %c0_i32 = arith.constant 0 : i32
    %c0_i32_0 = arith.constant 0 : i32
    %c0_i32_1 = arith.constant 0 : i32
    %c0_i32_2 = arith.constant 0 : i32
    return %c0_i32, %c0_i32_0, %c0_i32_1 : i32, i32, i32
  }
  func.func @transform_6(%arg0: i32) -> (i32, i32, i32) {
    %c1_i32 = arith.constant 1 : i32
    %c0_i32 = arith.constant 0 : i32
    %c0_i32_0 = arith.constant 0 : i32
    return %c1_i32, %arg0, %c0_i32 : i32, i32, i32
  }
  func.func @transform_7(%arg0: i32) -> (i32, i32, i32) {
    %c1_i32 = arith.constant 1 : i32
    %c0_i32 = arith.constant 0 : i32
    %c0_i32_0 = arith.constant 0 : i32
    %c0_i32_1 = arith.constant 0 : i32
    return %c1_i32, %c0_i32, %c0_i32_0 : i32, i32, i32
  }
  func.func @transform_8(%arg0: i32) -> (i32, i32, i32) {
    %c1_i32 = arith.constant 1 : i32
    %c0_i32 = arith.constant 0 : i32
    %c0_i32_0 = arith.constant 0 : i32
    %c0_i32_1 = arith.constant 0 : i32
    return %c1_i32, %c0_i32, %c0_i32_0 : i32, i32, i32
  }
  func.func @transform_9(%arg0: i32) -> (i32, i32, i32) {
    %c1_i32 = arith.constant 1 : i32
    %c0_i32 = arith.constant 0 : i32
    %c0_i32_0 = arith.constant 0 : i32
    %c0_i32_1 = arith.constant 0 : i32
    return %c1_i32, %c0_i32, %c0_i32_0 : i32, i32, i32
  }
  func.func @transform_10(%arg0: i32) -> (i32, i32, i32) {
    %c1_i32 = arith.constant 1 : i32
    %c0_i32 = arith.constant 0 : i32
    %c0_i32_0 = arith.constant 0 : i32
    %c0_i32_1 = arith.constant 0 : i32
    return %c1_i32, %c0_i32, %c0_i32_0 : i32, i32, i32
  }
  func.func @transform_11(%arg0: i32) -> (i32, i32, i32) {
    %c1_i32 = arith.constant 1 : i32
    %c0_i32 = arith.constant 0 : i32
    %c0_i32_0 = arith.constant 0 : i32
    %c0_i32_1 = arith.constant 0 : i32
    return %c1_i32, %c0_i32, %c0_i32_0 : i32, i32, i32
  }
}

</mosaic_0001>

<llo_original>
// kernel: tpu_custom_call.1
$region0: #{tpu_custom_call.1}
  #allocation0 [shape = 'u32[]', space=smem, size = 0x4, offset = 0x4, fixed_abs, tag = 'smem constant byte address 0x4 - core index']
  #allocation1 [shape = 'u32[144,128]{1,0:T(1,128)}', space=vmem, size = 0x12000, scoped, tag = 'internal scratch']
  #allocation22 [shape = 's32[]', space=sflag, size = 0x4, offset = 0, fixed_abs, tag = 'sflag constant byte address 0x0 - dummy sync flag']
  %s0 = inlined_call_operand.hbm [shape: bf16[2,768,256], index: 0, kind: input, shape index: {}, may-alias: {0,6}]
  %s1 = inlined_call_operand.hbm [shape: f32[2,1,256], index: 1, kind: input, shape index: {}, may-alias: {1,7}]
  %s2 = inlined_call_operand.hbm [shape: bf16[2,256,256], index: 2, kind: input, shape index: {}, may-alias: {2,8}]
  %s3 = inlined_call_operand.hbm [shape: f32[2,1,256], index: 3, kind: input, shape index: {}, may-alias: {3,9}]
  %s4 = inlined_call_operand.hbm [shape: bf16[2,256,128], index: 4, kind: input, shape index: {}, may-alias: {4,10}]
  %s5 = inlined_call_operand.hbm [shape: f32[2,1,128], index: 5, kind: input, shape index: {}, may-alias: {5,11}]
  %s6 = inlined_call_operand.hbm [shape: bf16[2,768,256], index: 6, kind: output, shape index: {0}, may-alias: {0,6}]
  %s7 = inlined_call_operand.hbm [shape: f32[2,1,256], index: 7, kind: output, shape index: {1}, may-alias: {1,7}]
  %s8 = inlined_call_operand.hbm [shape: bf16[2,256,256], index: 8, kind: output, shape index: {2}, may-alias: {2,8}]
  %s9 = inlined_call_operand.hbm [shape: f32[2,1,256], index: 9, kind: output, shape index: {3}, may-alias: {3,9}]
  %s10 = inlined_call_operand.hbm [shape: bf16[2,256,128], index: 10, kind: output, shape index: {4}, may-alias: {4,10}]
  %s11 = inlined_call_operand.hbm [shape: f32[2,1,128], index: 11, kind: output, shape index: {5}, may-alias: {5,11}]
  %12 = xla_tuple %s6, %s7, %s8, %s9, %s10, %s11
  %s13 = sld [smem:[#allocation0]]
  $region121: #{tpu_custom_call.1} parent=0
    _
  %s15 = ssub.s32 1, %s13
  %s16 = scalar_select 0, %s15, %s13
  $region1: #{tpu_custom_call.1} parent=0
    #allocation2 [shape = 'u8[524288]{0}', space=vmem, size = 0x80000, scoped, tag = 'input window, operand 0']
    #allocation3 [shape = 's32[2]{0}', space=sflag, size = 0x8, scoped, tag = 'scoped memory for tpu_custom_call.1']
    #allocation4 [shape = 's32[2]{0}', space=sflag, size = 0x8, scoped, tag = 'scoped memory for tpu_custom_call.1']
    #allocation5 [shape = 'u8[2048]{0}', space=vmem, size = 0x800, scoped, tag = 'input window, operand 1, single buffered']
    #allocation6 [shape = 's32[1]{0}', space=sflag, size = 0x4, scoped, tag = 'scoped memory for tpu_custom_call.1']
    #allocation7 [shape = 'u8[262144]{0}', space=vmem, size = 0x40000, scoped, tag = 'input window, operand 2, single buffered']
    #allocation8 [shape = 'u8[2048]{0}', space=vmem, size = 0x800, scoped, tag = 'input window, operand 3, single buffered']
    #allocation9 [shape = 's32[1]{0}', space=sflag, size = 0x4, scoped, tag = 'scoped memory for tpu_custom_call.1']
    #allocation10 [shape = 'u8[131072]{0}', space=vmem, size = 0x20000, scoped, tag = 'input window, operand 4, single buffered']
    #allocation11 [shape = 'u8[1024]{0}', space=vmem, size = 0x400, scoped, tag = 'input window, operand 5, single buffered']
    #allocation12 [shape = 's32[1]{0}', space=sflag, size = 0x4, scoped, tag = 'scoped memory for tpu_custom_call.1']
    #allocation13 [shape = 'u8[262144]{0}', space=vmem, size = 0x40000, scoped, tag = 'output window, operand 0']
    #allocation14 [shape = 'u8[1024]{0}', space=vmem, size = 0x400, scoped, tag = 'output window, operand 1, single buffered']
    #allocation15 [shape = 's32[1]{0}', space=sflag, size = 0x4, scoped, tag = 'scoped memory for tpu_custom_call.1']
    #allocation16 [shape = 'u8[131072]{0}', space=vmem, size = 0x20000, scoped, tag = 'output window, operand 2, single buffered']
    #allocation17 [shape = 'u8[1024]{0}', space=vmem, size = 0x400, scoped, tag = 'output window, operand 3, single buffered']
    #allocation18 [shape = 's32[1]{0}', space=sflag, size = 0x4, scoped, tag = 'scoped memory for tpu_custom_call.1']
    #allocation19 [shape = 'u8[65536]{0}', space=vmem, size = 0x10000, scoped, tag = 'output window, operand 4, single buffered']
    #allocation20 [shape = 'u8[512]{0}', space=vmem, size = 0x400, scoped, tag = 'output window, operand 5, single buffered']
    #allocation21 [shape = 's32[1]{0}', space=sflag, size = 0x4, scoped, tag = 'scoped memory for tpu_custom_call.1']
    %17 = vsyncpa [#allocation3], 0
    %s18 = scalar_lea.sflag [#allocation3], 1
    %19 = vsyncpa %s18, 0
    %20 = vsyncpa [#allocation6], 0
    %21 = vsyncpa [#allocation9], 0
    %22 = vsyncpa [#allocation12], 0
    %23 = vsyncpa [#allocation4], 0
    %s24 = scalar_lea.sflag [#allocation4], 1
    %25 = vsyncpa %s24, 0
    %26 = vsyncpa [#allocation15], 0
    %27 = vsyncpa [#allocation18], 0
    %28 = vsyncpa [#allocation21], 0
    loop: start=0, step=1, limit=5
    $region2: #{tpu_custom_call.1} parent=1 // loop_pre_header
      _
    $region3: #{tpu_custom_call.1} parent=1 // loop_header
      %s30 = sphi 0, %s34
      %p31 = scmp.ge.s32.totalorder %s30, 5
      %s40 = sphi 0, %s42
      %s43 = sphi 0, %s40
      %s44 = sphi 0, %s43
      %s60 = sphi 0, %s44
      %s64 = sphi 0, %s64
      %s66 = sphi 0, %s64
      %s67 = sphi 0, %s66
      %s81 = sphi 0, %s67
      %s85 = sphi 0, %s85
      %s87 = sphi 0, %s85
      %s88 = sphi 0, %s87
      %s102 = sphi 0, %s88
      %s106 = sphi 0, %s106
      %s108 = sphi 0, %s106
      %s109 = sphi 0, %s108
      %s123 = sphi 0, %s109
      %s127 = sphi 0, %s127
      %s129 = sphi 0, %s127
      %s130 = sphi 0, %s129
      %s144 = sphi 0, %s130
      %s148 = sphi 0, %s148
      %s150 = sphi 0, %s148
      %s151 = sphi 0, %s150
      %s165 = sphi 0, %s151
      %s171 = sphi 0, %s173
      %s174 = sphi 0, %s171
      %s175 = sphi 0, %s174
      %s191 = sphi 0, %s175
      %s195 = sphi 0, %s195
      %s197 = sphi 0, %s195
      %s198 = sphi 0, %s197
      %s212 = sphi 0, %s198
      %s216 = sphi 0, %s216
      %s218 = sphi 0, %s216
      %s219 = sphi 0, %s218
      %s233 = sphi 0, %s219
      %s237 = sphi 0, %s237
      %s239 = sphi 0, %s237
      %s240 = sphi 0, %s239
      %s254 = sphi 0, %s240
      %s258 = sphi 0, %s258
      %s260 = sphi 0, %s258
      %s261 = sphi 0, %s260
      %s275 = sphi 0, %s261
      %s279 = sphi 0, %s279
      %s281 = sphi 0, %s279
      %s282 = sphi 0, %s281
      %s296 = sphi 0, %s282
    $region4: #{tpu_custom_call.1} parent=1 // loop_header_branch
      %33 = sbr.rel (%p31) target = $region8
    $region5: #{tpu_custom_call.1} parent=1 // loop_body
      %s35 = ssub.s32 %s30, 1
      %s36 = ssub.s32 %s30, 2
      %s37 = sadd.s32 %s30, 1
      %s38 = ssub.s32 %s30, %s37
      %p39 = scmp.eq.s32.totalorder %s38, 0
      %s41 = sadd.s32 %s40, 1
      %s42 = scalar_select %p39, %s40, %s41
      %p45 = pneg %p39
      %p46 = scmp.eq.s32.totalorder %s30, 2
      %p47 = por %p45, %p46
      %p48 = scmp.ne.s32.totalorder %s40, %s43
      %p49 = scmp.eq.s32.totalorder %s30, 0
      %p50 = por %p48, %p49
      %p51 = scmp.ne.s32.totalorder %s40, %s43
      %p52 = scmp.eq.s32.totalorder %s35, 2
      %p53 = por %p51, %p52
      %p54 = scmp.ne.s32.totalorder %s43, %s44
      %p55 = scmp.eq.s32.totalorder %s35, 0
      %p56 = por %p54, %p55
      %p57 = scmp.ne.s32.totalorder %s43, %s44
      %p58 = scmp.eq.s32.totalorder %s36, 2
      %p59 = por %p57, %p58
      %p61 = scmp.ne.s32.totalorder %s44, %s60
      %p62 = scmp.eq.s32.totalorder %s36, 0
      %p63 = por %p61, %p62
      %s65 = sadd.s32 %s64, 1
      %p68 = scmp.eq.s32.totalorder %s30, 2
      %p69 = scmp.ne.s32.totalorder %s64, %s66
      %p70 = scmp.eq.s32.totalorder %s30, 0
      %p71 = por %p69, %p70
      %p72 = scmp.ne.s32.totalorder %s64, %s66
      %p73 = scmp.eq.s32.totalorder %s35, 2
      %p74 = por %p72, %p73
      %p75 = scmp.ne.s32.totalorder %s66, %s67
      %p76 = scmp.eq.s32.totalorder %s35, 0
      %p77 = por %p75, %p76
      %p78 = scmp.ne.s32.totalorder %s66, %s67
      %p79 = scmp.eq.s32.totalorder %s36, 2
      %p80 = por %p78, %p79
      %p82 = scmp.ne.s32.totalorder %s67, %s81
      %p83 = scmp.eq.s32.totalorder %s36, 0
      %p84 = por %p82, %p83
      %s86 = sadd.s32 %s85, 1
      %p89 = scmp.eq.s32.totalorder %s30, 2
      %p90 = scmp.ne.s32.totalorder %s85, %s87
      %p91 = scmp.eq.s32.totalorder %s30, 0
      %p92 = por %p90, %p91
      %p93 = scmp.ne.s32.totalorder %s85, %s87
      %p94 = scmp.eq.s32.totalorder %s35, 2
      %p95 = por %p93, %p94
      %p96 = scmp.ne.s32.totalorder %s87, %s88
      %p97 = scmp.eq.s32.totalorder %s35, 0
      %p98 = por %p96, %p97
      %p99 = scmp.ne.s32.totalorder %s87, %s88
      %p100 = scmp.eq.s32.totalorder %s36, 2
      %p101 = por %p99, %p100
      %p103 = scmp.ne.s32.totalorder %s88, %s102
      %p104 = scmp.eq.s32.totalorder %s36, 0
      %p105 = por %p103, %p104
      %s107 = sadd.s32 %s106, 1
      %p110 = scmp.eq.s32.totalorder %s30, 2
      %p111 = scmp.ne.s32.totalorder %s106, %s108
      %p112 = scmp.eq.s32.totalorder %s30, 0
      %p113 = por %p111, %p112
      %p114 = scmp.ne.s32.totalorder %s106, %s108
      %p115 = scmp.eq.s32.totalorder %s35, 2
      %p116 = por %p114, %p115
      %p117 = scmp.ne.s32.totalorder %s108, %s109
      %p118 = scmp.eq.s32.totalorder %s35, 0
      %p119 = por %p117, %p118
      %p120 = scmp.ne.s32.totalorder %s108, %s109
      %p121 = scmp.eq.s32.totalorder %s36, 2
      %p122 = por %p120, %p121
      %p124 = scmp.ne.s32.totalorder %s109, %s123
      %p125 = scmp.eq.s32.totalorder %s36, 0
      %p126 = por %p124, %p125
      %s128 = sadd.s32 %s127, 1
      %p131 = scmp.eq.s32.totalorder %s30, 2
      %p132 = scmp.ne.s32.totalorder %s127, %s129
      %p133 = scmp.eq.s32.totalorder %s30, 0
      %p134 = por %p132, %p133
      %p135 = scmp.ne.s32.totalorder %s127, %s129
      %p136 = scmp.eq.s32.totalorder %s35, 2
      %p137 = por %p135, %p136
      %p138 = scmp.ne.s32.totalorder %s129, %s130
      %p139 = scmp.eq.s32.totalorder %s35, 0
      %p140 = por %p138, %p139
      %p141 = scmp.ne.s32.totalorder %s129, %s130
      %p142 = scmp.eq.s32.totalorder %s36, 2
      %p143 = por %p141, %p142
      %p145 = scmp.ne.s32.totalorder %s130, %s144
      %p146 = scmp.eq.s32.totalorder %s36, 0
      %p147 = por %p145, %p146
      %s149 = sadd.s32 %s148, 1
      %p152 = scmp.eq.s32.totalorder %s30, 2
      %p153 = scmp.ne.s32.totalorder %s148, %s150
      %p154 = scmp.eq.s32.totalorder %s30, 0
      %p155 = por %p153, %p154
      %p156 = scmp.ne.s32.totalorder %s148, %s150
      %p157 = scmp.eq.s32.totalorder %s35, 2
      %p158 = por %p156, %p157
      %p159 = scmp.ne.s32.totalorder %s150, %s151
      %p160 = scmp.eq.s32.totalorder %s35, 0
      %p161 = por %p159, %p160
      %p162 = scmp.ne.s32.totalorder %s150, %s151
      %p163 = scmp.eq.s32.totalorder %s36, 2
      %p164 = por %p162, %p163
      %p166 = scmp.ne.s32.totalorder %s151, %s165
      %p167 = scmp.eq.s32.totalorder %s36, 0
      %p168 = por %p166, %p167
      %s169 = ssub.s32 %s30, %s37
      %p170 = scmp.eq.s32.totalorder %s169, 0
      %s172 = sadd.s32 %s171, 1
      %s173 = scalar_select %p170, %s171, %s172
      %p176 = pneg %p170
      %p177 = scmp.eq.s32.totalorder %s30, 2
      %p178 = por %p176, %p177
      %p179 = scmp.ne.s32.totalorder %s171, %s174
      %p180 = scmp.eq.s32.totalorder %s30, 0
      %p181 = por %p179, %p180
      %p182 = scmp.ne.s32.totalorder %s171, %s174
      %p183 = scmp.eq.s32.totalorder %s35, 2
      %p184 = por %p182, %p183
      %p185 = scmp.ne.s32.totalorder %s174, %s175
      %p186 = scmp.eq.s32.totalorder %s35, 0
      %p187 = por %p185, %p186
      %p188 = scmp.ne.s32.totalorder %s174, %s175
      %p189 = scmp.eq.s32.totalorder %s36, 2
      %p190 = por %p188, %p189
      %p192 = scmp.ne.s32.totalorder %s175, %s191
      %p193 = scmp.eq.s32.totalorder %s36, 0
      %p194 = por %p192, %p193
      %s196 = sadd.s32 %s195, 1
      %p199 = scmp.eq.s32.totalorder %s30, 2
      %p200 = scmp.ne.s32.totalorder %s195, %s197
      %p201 = scmp.eq.s32.totalorder %s30, 0
      %p202 = por %p200, %p201
      %p203 = scmp.ne.s32.totalorder %s195, %s197
      %p204 = scmp.eq.s32.totalorder %s35, 2
      %p205 = por %p203, %p204
      %p206 = scmp.ne.s32.totalorder %s197, %s198
      %p207 = scmp.eq.s32.totalorder %s35, 0
      %p208 = por %p206, %p207
      %p209 = scmp.ne.s32.totalorder %s197, %s198
      %p210 = scmp.eq.s32.totalorder %s36, 2
      %p211 = por %p209, %p210
      %p213 = scmp.ne.s32.totalorder %s198, %s212
      %p214 = scmp.eq.s32.totalorder %s36, 0
      %p215 = por %p213, %p214
      %s217 = sadd.s32 %s216, 1
      %p220 = scmp.eq.s32.totalorder %s30, 2
      %p221 = scmp.ne.s32.totalorder %s216, %s218
      %p222 = scmp.eq.s32.totalorder %s30, 0
      %p223 = por %p221, %p222
      %p224 = scmp.ne.s32.totalorder %s216, %s218
      %p225 = scmp.eq.s32.totalorder %s35, 2
      %p226 = por %p224, %p225
      %p227 = scmp.ne.s32.totalorder %s218, %s219
      %p228 = scmp.eq.s32.totalorder %s35, 0
      %p229 = por %p227, %p228
      %p230 = scmp.ne.s32.totalorder %s218, %s219
      %p231 = scmp.eq.s32.totalorder %s36, 2
      %p232 = por %p230, %p231
      %p234 = scmp.ne.s32.totalorder %s219, %s233
      %p235 = scmp.eq.s32.totalorder %s36, 0
      %p236 = por %p234, %p235
      %s238 = sadd.s32 %s237, 1
      %p241 = scmp.eq.s32.totalorder %s30, 2
      %p242 = scmp.ne.s32.totalorder %s237, %s239
      %p243 = scmp.eq.s32.totalorder %s30, 0
      %p244 = por %p242, %p243
      %p245 = scmp.ne.s32.totalorder %s237, %s239
      %p246 = scmp.eq.s32.totalorder %s35, 2
      %p247 = por %p245, %p246
      %p248 = scmp.ne.s32.totalorder %s239, %s240
      %p249 = scmp.eq.s32.totalorder %s35, 0
      %p250 = por %p248, %p249
      %p251 = scmp.ne.s32.totalorder %s239, %s240
      %p252 = scmp.eq.s32.totalorder %s36, 2
      %p253 = por %p251, %p252
      %p255 = scmp.ne.s32.totalorder %s240, %s254
      %p256 = scmp.eq.s32.totalorder %s36, 0
      %p257 = por %p255, %p256
      %s259 = sadd.s32 %s258, 1
      %p262 = scmp.eq.s32.totalorder %s30, 2
      %p263 = scmp.ne.s32.totalorder %s258, %s260
      %p264 = scmp.eq.s32.totalorder %s30, 0
      %p265 = por %p263, %p264
      %p266 = scmp.ne.s32.totalorder %s258, %s260
      %p267 = scmp.eq.s32.totalorder %s35, 2
      %p268 = por %p266, %p267
      %p269 = scmp.ne.s32.totalorder %s260, %s261
      %p270 = scmp.eq.s32.totalorder %s35, 0
      %p271 = por %p269, %p270
      %p272 = scmp.ne.s32.totalorder %s260, %s261
      %p273 = scmp.eq.s32.totalorder %s36, 2
      %p274 = por %p272, %p273
      %p276 = scmp.ne.s32.totalorder %s261, %s275
      %p277 = scmp.eq.s32.totalorder %s36, 0
      %p278 = por %p276, %p277
      %s280 = sadd.s32 %s279, 1
      %p283 = scmp.eq.s32.totalorder %s30, 2
      %p284 = scmp.ne.s32.totalorder %s279, %s281
      %p285 = scmp.eq.s32.totalorder %s30, 0
      %p286 = por %p284, %p285
      %p287 = scmp.ne.s32.totalorder %s279, %s281
      %p288 = scmp.eq.s32.totalorder %s35, 2
      %p289 = por %p287, %p288
      %p290 = scmp.ne.s32.totalorder %s281, %s282
      %p291 = scmp.eq.s32.totalorder %s35, 0
      %p292 = por %p290, %p291
      %p293 = scmp.ne.s32.totalorder %s281, %s282
      %p294 = scmp.eq.s32.totalorder %s36, 2
      %p295 = por %p293, %p294
      %p297 = scmp.ne.s32.totalorder %s282, %s296
      %p298 = scmp.eq.s32.totalorder %s36, 0
      %p299 = por %p297, %p298
      %p300 = scmp.le.s32.totalorder 1, %s30
      %p301 = scmp.lt.s32.totalorder %s30, 4
      %p302 = pnand %p300, %p301
      %p303 = pneg %p302
      // Predicated region
      $region9: #{tpu_custom_call.1} parent=5 // pred_check
        _
      $region10: #{tpu_custom_call.1} parent=5 // pred_check_branch
        %305 = sbr.rel (%p302) target = $region12
      $region11: #{tpu_custom_call.1} parent=5 // pred_region
        %s306 = ssub.s32 %s30, 1
        // Predicated region
        $region13: #{tpu_custom_call.1} parent=11 // pred_check
          %p307 = pneg %p77
        $region14: #{tpu_custom_call.1} parent=11 // pred_check_branch
          %309 = sbr.rel (%p307) target = $region16
        $region15: #{tpu_custom_call.1} parent=11 // pred_region
          %s311 = ssub.s32 64, 64
          %312 = vsyncadd [#allocation6], %s311
          %s313 = sshll.u32 [#allocation5], 4
          %s314 = int_to_ptr.vmem [resolvable:$true] %s313
          %319 = dma.hbm_to_vmem [thread:$0]  %s1, 64, %s314, [#allocation6], 32, 32, 2
        $region16: #{tpu_custom_call.1} parent=11 // pred_fallthru
          _
        // Predicated region
        $region17: #{tpu_custom_call.1} parent=11 // pred_check
          %p320 = pneg %p98
        $region18: #{tpu_custom_call.1} parent=11 // pred_check_branch
          %322 = sbr.rel (%p320) target = $region20
        $region19: #{tpu_custom_call.1} parent=11 // pred_region
          %s324 = ssub.s32 8192, 8192
          %325 = vsyncadd [#allocation6], %s324
          %s326 = sshll.u32 [#allocation7], 4
          %s327 = int_to_ptr.vmem [resolvable:$true] %s326
          %332 = dma.hbm_to_vmem [thread:$0]  %s2, 8192, %s327, [#allocation6], 128, 128, 8
        $region20: #{tpu_custom_call.1} parent=11 // pred_fallthru
          _
        // Predicated region
        $region21: #{tpu_custom_call.1} parent=11 // pred_check
          %p333 = pneg %p119
        $region22: #{tpu_custom_call.1} parent=11 // pred_check_branch
          %335 = sbr.rel (%p333) target = $region24
        $region23: #{tpu_custom_call.1} parent=11 // pred_region
          %s337 = ssub.s32 64, 64
          %338 = vsyncadd [#allocation9], %s337
          %s339 = sshll.u32 [#allocation8], 4
          %s340 = int_to_ptr.vmem [resolvable:$true] %s339
          %345 = dma.hbm_to_vmem [thread:$0]  %s3, 64, %s340, [#allocation9], 32, 32, 2
        $region24: #{tpu_custom_call.1} parent=11 // pred_fallthru
          _
        // Predicated region
        $region25: #{tpu_custom_call.1} parent=11 // pred_check
          %p346 = pneg %p140
        $region26: #{tpu_custom_call.1} parent=11 // pred_check_branch
          %348 = sbr.rel (%p346) target = $region28
        $region27: #{tpu_custom_call.1} parent=11 // pred_region
          %s350 = ssub.s32 4096, 4096
          %351 = vsyncadd [#allocation9], %s350
          %s352 = sshll.u32 [#allocation10], 4
          %s353 = int_to_ptr.vmem [resolvable:$true] %s352
          %358 = dma.hbm_to_vmem [thread:$0]  %s4, 4096, %s353, [#allocation9], 64, 64, 4
        $region28: #{tpu_custom_call.1} parent=11 // pred_fallthru
          _
        // Predicated region
        $region29: #{tpu_custom_call.1} parent=11 // pred_check
          %p359 = pneg %p161
        $region30: #{tpu_custom_call.1} parent=11 // pred_check_branch
          %361 = sbr.rel (%p359) target = $region32
        $region31: #{tpu_custom_call.1} parent=11 // pred_region
          %s363 = ssub.s32 32, 32
          %364 = vsyncadd [#allocation12], %s363
          %s365 = sshll.u32 [#allocation11], 4
          %s366 = int_to_ptr.vmem [resolvable:$true] %s365
          %371 = dma.hbm_to_vmem [thread:$0]  %s5, 32, %s366, [#allocation12], 16, 16, 1
        $region32: #{tpu_custom_call.1} parent=11 // pred_fallthru
          _
      $region12: #{tpu_custom_call.1} parent=5 // pred_fallthru
        _
      %p372 = scmp.lt.s32.totalorder %s30, 3
      // Predicated region
      $region33: #{tpu_custom_call.1} parent=5 // pred_check
        %p373 = pneg %p372
      $region34: #{tpu_custom_call.1} parent=5 // pred_check_branch
        %375 = sbr.rel (%p373) target = $region36
      $region35: #{tpu_custom_call.1} parent=5 // pred_region
        // Predicated region
        $region37: #{tpu_custom_call.1} parent=35 // pred_check
          %p376 = pneg %p50
        $region38: #{tpu_custom_call.1} parent=35 // pred_check_branch
          %378 = sbr.rel (%p376) target = $region40
        $region39: #{tpu_custom_call.1} parent=35 // pred_region
          #allocation23 [shape = 'u32[6]{0}', space=smem, size = 0x18, scoped, tag = 'DMA stride descriptor']
          %s379 = sand.u32 %s40, 1
          %s380 = scalar_lea.sflag [#allocation3], %s379
          %s381 = sand.u32 %s40, 1
          %s382 = smul.addr %s381, 512
          %s383 = scalar_lea.vmem [#allocation2], %s382
          %s384 = smul.u32 32, %s30
          %s386 = ssub.s32 8192, 8192
          %387 = vsyncadd %s380, %s386
          %s388 = smul.addr %s384, 2
          %s389 = smul.addr %s388, 64
          %s390 = scalar_lea.hbm %s0, %s389
          %s392 = sshll.u32 1, 14
          %s393 = sxor.u32 4294967295, %s392
          %s395 = sld [smem:[#allocation0]]
          %s396 = sadd.s32 2, %s395
          %s398 = sshll.u32 7, 26
          %s399 = sxor.u32 4294967295, %s398
          %s400 = sand.u32 0, %s399
          %s401 = sshll.u32 %s396, 26
          %s402 = sor.u32 %s400, %s401
          %s403 = sshll.u32 %s383, 4
          %s404 = int_to_ptr.vmem [resolvable:$true] %s403
          %410 = sst [smem:[#allocation23]] 12288
          %s411 = scalar_lea.smem [#allocation23], 1
          %412 = sst [smem:[%s411]] 4096
          %s413 = scalar_lea.smem [#allocation23], 2
          %414 = sst [smem:[%s413]] 32
          %s415 = scalar_lea.smem [#allocation23], 3
          %416 = sst [smem:[%s415]] 128
          %s417 = scalar_lea.smem [#allocation23], 4
          %418 = sst [smem:[%s417]] 128
          %s419 = scalar_lea.smem [#allocation23], 5
          %420 = sst [smem:[%s419]] 8
          %422 = dma.general %s390, 8192, %s404, %s380, [#allocation22], [#allocation23], %s402, 0
        $region40: #{tpu_custom_call.1} parent=35 // pred_fallthru
          _
      $region36: #{tpu_custom_call.1} parent=5 // pred_fallthru
        _
      %p423 = scmp.le.s32.totalorder 1, %s30
      %p424 = scmp.lt.s32.totalorder %s30, 4
      %p425 = pnand %p423, %p424
      %p426 = pneg %p425
      // Predicated region
      $region41: #{tpu_custom_call.1} parent=5 // pred_check
        _
      $region42: #{tpu_custom_call.1} parent=5 // pred_check_branch
        %428 = sbr.rel (%p425) target = $region44
      $region43: #{tpu_custom_call.1} parent=5 // pred_region
        %s429 = ssub.s32 %s30, 1
        %s430 = sand.u32 %s43, 1
        %s431 = scalar_lea.sflag [#allocation3], %s430
        %s432 = sand.u32 %s43, 1
        %s433 = smul.addr %s432, 512
        %s434 = scalar_lea.vmem [#allocation2], %s433
        // Predicated region
        $region45: #{tpu_custom_call.1} parent=43 // pred_check
          %p435 = pneg %p56
        $region46: #{tpu_custom_call.1} parent=43 // pred_check_branch
          %437 = sbr.rel (%p435) target = $region48
        $region47: #{tpu_custom_call.1} parent=43 // pred_region
          %438 = dma.done %s431, 8192
        $region48: #{tpu_custom_call.1} parent=43 // pred_fallthru
          _
        // Predicated region
        $region49: #{tpu_custom_call.1} parent=43 // pred_check
          %p439 = pneg %p77
        $region50: #{tpu_custom_call.1} parent=43 // pred_check_branch
          %441 = sbr.rel (%p439) target = $region52
        $region51: #{tpu_custom_call.1} parent=43 // pred_region
          %442 = dma.done [#allocation6], 64
        $region52: #{tpu_custom_call.1} parent=43 // pred_fallthru
          _
        // Predicated region
        $region53: #{tpu_custom_call.1} parent=43 // pred_check
          %p443 = pneg %p98
        $region54: #{tpu_custom_call.1} parent=43 // pred_check_branch
          %445 = sbr.rel (%p443) target = $region56
        $region55: #{tpu_custom_call.1} parent=43 // pred_region
          %446 = dma.done [#allocation6], 8192
        $region56: #{tpu_custom_call.1} parent=43 // pred_fallthru
          _
        // Predicated region
        $region57: #{tpu_custom_call.1} parent=43 // pred_check
          %p447 = pneg %p119
        $region58: #{tpu_custom_call.1} parent=43 // pred_check_branch
          %449 = sbr.rel (%p447) target = $region60
        $region59: #{tpu_custom_call.1} parent=43 // pred_region
          %450 = dma.done [#allocation9], 64
        $region60: #{tpu_custom_call.1} parent=43 // pred_fallthru
          _
        // Predicated region
        $region61: #{tpu_custom_call.1} parent=43 // pred_check
          %p451 = pneg %p140
        $region62: #{tpu_custom_call.1} parent=43 // pred_check_branch
          %453 = sbr.rel (%p451) target = $region64
        $region63: #{tpu_custom_call.1} parent=43 // pred_region
          %454 = dma.done [#allocation9], 4096
        $region64: #{tpu_custom_call.1} parent=43 // pred_fallthru
          _
        // Predicated region
        $region65: #{tpu_custom_call.1} parent=43 // pred_check
          %p455 = pneg %p161
        $region66: #{tpu_custom_call.1} parent=43 // pred_check_branch
          %457 = sbr.rel (%p455) target = $region68
        $region67: #{tpu_custom_call.1} parent=43 // pred_region
          %458 = dma.done [#allocation12], 32
        $region68: #{tpu_custom_call.1} parent=43 // pred_fallthru
          _
        %s459 = sand.u32 %s43, 1
        %s460 = scalar_lea.sflag [#allocation3], %s459
        %s461 = sand.u32 %s43, 1
        %s462 = smul.addr %s461, 512
        %s463 = scalar_lea.vmem [#allocation2], %s462
        %p464 = pneg %p56
        %p465 = pneg %p53
        %p466 = pneg %p77
        %p467 = pneg %p74
        %p468 = pneg %p98
        %p469 = pneg %p95
        %p470 = pneg %p119
        %p471 = pneg %p116
        %p472 = pneg %p140
        %p473 = pneg %p137
        %p474 = pneg %p161
        %p475 = pneg %p158
        %p476 = pneg %p187
        %p477 = pneg %p184
        %s478 = sand.u32 %s174, 1
        %s479 = scalar_lea.sflag [#allocation4], %s478
        %s480 = sand.u32 %s174, 1
        %s481 = smul.addr %s480, 256
        %s482 = scalar_lea.vmem [#allocation13], %s481
        %p483 = pneg %p208
        %p484 = pneg %p205
        %p485 = pneg %p229
        %p486 = pneg %p226
        %p487 = pneg %p250
        %p488 = pneg %p247
        %p489 = pneg %p271
        %p490 = pneg %p268
        %p491 = pneg %p292
        %p492 = pneg %p289
        %s493 = smul.u32 32, %s35
        %s494 = smul.u32 32, %s35
        %v495 = vld [vmem:[%s434] sm:$0xff]
        %v496 = vld [vmem:[%s434 + $0x8] sm:$0xff]
        %v497 = vld [vmem:[%s434 + $0x10] sm:$0xff]
        %v498 = vld [vmem:[%s434 + $0x18] sm:$0xff]
        %v499 = vld [vmem:[%s434 + $0x20] sm:$0xff]
        %v500 = vld [vmem:[%s434 + $0x28] sm:$0xff]
        %v501 = vld [vmem:[%s434 + $0x30] sm:$0xff]
        %v502 = vld [vmem:[%s434 + $0x38] sm:$0xff]
        %v503 = vld [vmem:[%s434 + $0x40] sm:$0xff]
        %v504 = vld [vmem:[%s434 + $0x48] sm:$0xff]
        %v505 = vld [vmem:[%s434 + $0x50] sm:$0xff]
        %v506 = vld [vmem:[%s434 + $0x58] sm:$0xff]
        %v507 = vld [vmem:[%s434 + $0x60] sm:$0xff]
        %v508 = vld [vmem:[%s434 + $0x68] sm:$0xff]
        %v509 = vld [vmem:[%s434 + $0x70] sm:$0xff]
        %v510 = vld [vmem:[%s434 + $0x78] sm:$0xff]
        %v511 = vld [vmem:[%s434 + $0x80] sm:$0xff]
        %v512 = vld [vmem:[%s434 + $0x88] sm:$0xff]
        %v513 = vld [vmem:[%s434 + $0x90] sm:$0xff]
        %v514 = vld [vmem:[%s434 + $0x98] sm:$0xff]
        %v515 = vld [vmem:[%s434 + $0xa0] sm:$0xff]
        %v516 = vld [vmem:[%s434 + $0xa8] sm:$0xff]
        %v517 = vld [vmem:[%s434 + $0xb0] sm:$0xff]
        %v518 = vld [vmem:[%s434 + $0xb8] sm:$0xff]
        %v519 = vld [vmem:[%s434 + $0xc0] sm:$0xff]
        %v520 = vld [vmem:[%s434 + $0xc8] sm:$0xff]
        %v521 = vld [vmem:[%s434 + $0xd0] sm:$0xff]
        %v522 = vld [vmem:[%s434 + $0xd8] sm:$0xff]
        %v523 = vld [vmem:[%s434 + $0xe0] sm:$0xff]
        %v524 = vld [vmem:[%s434 + $0xe8] sm:$0xff]
        %v525 = vld [vmem:[%s434 + $0xf0] sm:$0xff]
        %v526 = vld [vmem:[%s434 + $0xf8] sm:$0xff]
        %v527 = vunpack.c.l.bf16 %v495
        %v528 = vunpack.c.h.bf16 %v495
        %v529 = vunpack.c.l.bf16 %v496
        %v530 = vunpack.c.h.bf16 %v496
        %v531 = vunpack.c.l.bf16 %v497
        %v532 = vunpack.c.h.bf16 %v497
        %v533 = vunpack.c.l.bf16 %v498
        %v534 = vunpack.c.h.bf16 %v498
        %v535 = vunpack.c.l.bf16 %v499
        %v536 = vunpack.c.h.bf16 %v499
        %v537 = vunpack.c.l.bf16 %v500
        %v538 = vunpack.c.h.bf16 %v500
        %v539 = vunpack.c.l.bf16 %v501
        %v540 = vunpack.c.h.bf16 %v501
        %v541 = vunpack.c.l.bf16 %v502
        %v542 = vunpack.c.h.bf16 %v502
        %v543 = vunpack.c.l.bf16 %v503
        %v544 = vunpack.c.h.bf16 %v503
        %v545 = vunpack.c.l.bf16 %v504
        %v546 = vunpack.c.h.bf16 %v504
        %v547 = vunpack.c.l.bf16 %v505
        %v548 = vunpack.c.h.bf16 %v505
        %v549 = vunpack.c.l.bf16 %v506
        %v550 = vunpack.c.h.bf16 %v506
        %v551 = vunpack.c.l.bf16 %v507
        %v552 = vunpack.c.h.bf16 %v507
        %v553 = vunpack.c.l.bf16 %v508
        %v554 = vunpack.c.h.bf16 %v508
        %v555 = vunpack.c.l.bf16 %v509
        %v556 = vunpack.c.h.bf16 %v509
        %v557 = vunpack.c.l.bf16 %v510
        %v558 = vunpack.c.h.bf16 %v510
        %v559 = vunpack.c.l.bf16 %v511
        %v560 = vunpack.c.h.bf16 %v511
        %v561 = vunpack.c.l.bf16 %v512
        %v562 = vunpack.c.h.bf16 %v512
        %v563 = vunpack.c.l.bf16 %v513
        %v564 = vunpack.c.h.bf16 %v513
        %v565 = vunpack.c.l.bf16 %v514
        %v566 = vunpack.c.h.bf16 %v514
        %v567 = vunpack.c.l.bf16 %v515
        %v568 = vunpack.c.h.bf16 %v515
        %v569 = vunpack.c.l.bf16 %v516
        %v570 = vunpack.c.h.bf16 %v516
        %v571 = vunpack.c.l.bf16 %v517
        %v572 = vunpack.c.h.bf16 %v517
        %v573 = vunpack.c.l.bf16 %v518
        %v574 = vunpack.c.h.bf16 %v518
        %v575 = vunpack.c.l.bf16 %v519
        %v576 = vunpack.c.h.bf16 %v519
        %v577 = vunpack.c.l.bf16 %v520
        %v578 = vunpack.c.h.bf16 %v520
        %v579 = vunpack.c.l.bf16 %v521
        %v580 = vunpack.c.h.bf16 %v521
        %v581 = vunpack.c.l.bf16 %v522
        %v582 = vunpack.c.h.bf16 %v522
        %v583 = vunpack.c.l.bf16 %v523
        %v584 = vunpack.c.h.bf16 %v523
        %v585 = vunpack.c.l.bf16 %v524
        %v586 = vunpack.c.h.bf16 %v524
        %v587 = vunpack.c.l.bf16 %v525
        %v588 = vunpack.c.h.bf16 %v525
        %v589 = vunpack.c.l.bf16 %v526
        %v590 = vunpack.c.h.bf16 %v526
        %s591 = scalar_lea.vmem %s434, 256 [#allocation2]
        %v592 = vld [vmem:[%s591] sm:$0xff]
        %v593 = vld [vmem:[%s591 + $0x8] sm:$0xff]
        %v594 = vld [vmem:[%s591 + $0x10] sm:$0xff]
        %v595 = vld [vmem:[%s591 + $0x18] sm:$0xff]
        %v596 = vld [vmem:[%s591 + $0x20] sm:$0xff]
        %v597 = vld [vmem:[%s591 + $0x28] sm:$0xff]
        %v598 = vld [vmem:[%s591 + $0x30] sm:$0xff]
        %v599 = vld [vmem:[%s591 + $0x38] sm:$0xff]
        %v600 = vld [vmem:[%s591 + $0x40] sm:$0xff]
        %v601 = vld [vmem:[%s591 + $0x48] sm:$0xff]
        %v602 = vld [vmem:[%s591 + $0x50] sm:$0xff]
        %v603 = vld [vmem:[%s591 + $0x58] sm:$0xff]
        %v604 = vld [vmem:[%s591 + $0x60] sm:$0xff]
        %v605 = vld [vmem:[%s591 + $0x68] sm:$0xff]
        %v606 = vld [vmem:[%s591 + $0x70] sm:$0xff]
        %v607 = vld [vmem:[%s591 + $0x78] sm:$0xff]
        %v608 = vld [vmem:[%s591 + $0x80] sm:$0xff]
        %v609 = vld [vmem:[%s591 + $0x88] sm:$0xff]
        %v610 = vld [vmem:[%s591 + $0x90] sm:$0xff]
        %v611 = vld [vmem:[%s591 + $0x98] sm:$0xff]
        %v612 = vld [vmem:[%s591 + $0xa0] sm:$0xff]
        %v613 = vld [vmem:[%s591 + $0xa8] sm:$0xff]
        %v614 = vld [vmem:[%s591 + $0xb0] sm:$0xff]
        %v615 = vld [vmem:[%s591 + $0xb8] sm:$0xff]
        %v616 = vld [vmem:[%s591 + $0xc0] sm:$0xff]
        %v617 = vld [vmem:[%s591 + $0xc8] sm:$0xff]
        %v618 = vld [vmem:[%s591 + $0xd0] sm:$0xff]
        %v619 = vld [vmem:[%s591 + $0xd8] sm:$0xff]
        %v620 = vld [vmem:[%s591 + $0xe0] sm:$0xff]
        %v621 = vld [vmem:[%s591 + $0xe8] sm:$0xff]
        %v622 = vld [vmem:[%s591 + $0xf0] sm:$0xff]
        %v623 = vld [vmem:[%s591 + $0xf8] sm:$0xff]
        %v624 = vunpack.c.l.bf16 %v592
        %v625 = vunpack.c.h.bf16 %v592
        %v626 = vunpack.c.l.bf16 %v593
        %v627 = vunpack.c.h.bf16 %v593
        %v628 = vunpack.c.l.bf16 %v594
        %v629 = vunpack.c.h.bf16 %v594
        %v630 = vunpack.c.l.bf16 %v595
        %v631 = vunpack.c.h.bf16 %v595
        %v632 = vunpack.c.l.bf16 %v596
        %v633 = vunpack.c.h.bf16 %v596
        %v634 = vunpack.c.l.bf16 %v597
        %v635 = vunpack.c.h.bf16 %v597
        %v636 = vunpack.c.l.bf16 %v598
        %v637 = vunpack.c.h.bf16 %v598
        %v638 = vunpack.c.l.bf16 %v599
        %v639 = vunpack.c.h.bf16 %v599
        %v640 = vunpack.c.l.bf16 %v600
        %v641 = vunpack.c.h.bf16 %v600
        %v642 = vunpack.c.l.bf16 %v601
        %v643 = vunpack.c.h.bf16 %v601
        %v644 = vunpack.c.l.bf16 %v602
        %v645 = vunpack.c.h.bf16 %v602
        %v646 = vunpack.c.l.bf16 %v603
        %v647 = vunpack.c.h.bf16 %v603
        %v648 = vunpack.c.l.bf16 %v604
        %v649 = vunpack.c.h.bf16 %v604
        %v650 = vunpack.c.l.bf16 %v605
        %v651 = vunpack.c.h.bf16 %v605
        %v652 = vunpack.c.l.bf16 %v606
        %v653 = vunpack.c.h.bf16 %v606
        %v654 = vunpack.c.l.bf16 %v607
        %v655 = vunpack.c.h.bf16 %v607
        %v656 = vunpack.c.l.bf16 %v608
        %v657 = vunpack.c.h.bf16 %v608
        %v658 = vunpack.c.l.bf16 %v609
        %v659 = vunpack.c.h.bf16 %v609
        %v660 = vunpack.c.l.bf16 %v610
        %v661 = vunpack.c.h.bf16 %v610
        %v662 = vunpack.c.l.bf16 %v611
        %v663 = vunpack.c.h.bf16 %v611
        %v664 = vunpack.c.l.bf16 %v612
        %v665 = vunpack.c.h.bf16 %v612
        %v666 = vunpack.c.l.bf16 %v613
        %v667 = vunpack.c.h.bf16 %v613
        %v668 = vunpack.c.l.bf16 %v614
        %v669 = vunpack.c.h.bf16 %v614
        %v670 = vunpack.c.l.bf16 %v615
        %v671 = vunpack.c.h.bf16 %v615
        %v672 = vunpack.c.l.bf16 %v616
        %v673 = vunpack.c.h.bf16 %v616
        %v674 = vunpack.c.l.bf16 %v617
        %v675 = vunpack.c.h.bf16 %v617
        %v676 = vunpack.c.l.bf16 %v618
        %v677 = vunpack.c.h.bf16 %v618
        %v678 = vunpack.c.l.bf16 %v619
        %v679 = vunpack.c.h.bf16 %v619
        %v680 = vunpack.c.l.bf16 %v620
        %v681 = vunpack.c.h.bf16 %v620
        %v682 = vunpack.c.l.bf16 %v621
        %v683 = vunpack.c.h.bf16 %v621
        %v684 = vunpack.c.l.bf16 %v622
        %v685 = vunpack.c.h.bf16 %v622
        %v686 = vunpack.c.l.bf16 %v623
        %v687 = vunpack.c.h.bf16 %v623
        %v688 = vmul.f32 %v624, 0.999
        %v689 = vmul.f32 %v625, 0.999
        %v690 = vmul.f32 %v626, 0.999
        %v691 = vmul.f32 %v627, 0.999
        %v692 = vmul.f32 %v628, 0.999
        %v693 = vmul.f32 %v629, 0.999
        %v694 = vmul.f32 %v630, 0.999
        %v695 = vmul.f32 %v631, 0.999
        %v696 = vmul.f32 %v632, 0.999
        %v697 = vmul.f32 %v633, 0.999
        %v698 = vmul.f32 %v634, 0.999
        %v699 = vmul.f32 %v635, 0.999
        %v700 = vmul.f32 %v636, 0.999
        %v701 = vmul.f32 %v637, 0.999
        %v702 = vmul.f32 %v638, 0.999
        %v703 = vmul.f32 %v639, 0.999
        %v704 = vmul.f32 %v640, 0.999
        %v705 = vmul.f32 %v641, 0.999
        %v706 = vmul.f32 %v642, 0.999
        %v707 = vmul.f32 %v643, 0.999
        %v708 = vmul.f32 %v644, 0.999
        %v709 = vmul.f32 %v645, 0.999
        %v710 = vmul.f32 %v646, 0.999
        %v711 = vmul.f32 %v647, 0.999
        %v712 = vmul.f32 %v648, 0.999
        %v713 = vmul.f32 %v649, 0.999
        %v714 = vmul.f32 %v650, 0.999
        %v715 = vmul.f32 %v651, 0.999
        %v716 = vmul.f32 %v652, 0.999
        %v717 = vmul.f32 %v653, 0.999
        %v718 = vmul.f32 %v654, 0.999
        %v719 = vmul.f32 %v655, 0.999
        %v720 = vmul.f32 %v656, 0.999
        %v721 = vmul.f32 %v657, 0.999
        %v722 = vmul.f32 %v658, 0.999
        %v723 = vmul.f32 %v659, 0.999
        %v724 = vmul.f32 %v660, 0.999
        %v725 = vmul.f32 %v661, 0.999
        %v726 = vmul.f32 %v662, 0.999
        %v727 = vmul.f32 %v663, 0.999
        %v728 = vmul.f32 %v664, 0.999
        %v729 = vmul.f32 %v665, 0.999
        %v730 = vmul.f32 %v666, 0.999
        %v731 = vmul.f32 %v667, 0.999
        %v732 = vmul.f32 %v668, 0.999
        %v733 = vmul.f32 %v669, 0.999
        %v734 = vmul.f32 %v670, 0.999
        %v735 = vmul.f32 %v671, 0.999
        %v736 = vmul.f32 %v672, 0.999
        %v737 = vmul.f32 %v673, 0.999
        %v738 = vmul.f32 %v674, 0.999
        %v739 = vmul.f32 %v675, 0.999
        %v740 = vmul.f32 %v676, 0.999
        %v741 = vmul.f32 %v677, 0.999
        %v742 = vmul.f32 %v678, 0.999
        %v743 = vmul.f32 %v679, 0.999
        %v744 = vmul.f32 %v680, 0.999
        %v745 = vmul.f32 %v681, 0.999
        %v746 = vmul.f32 %v682, 0.999
        %v747 = vmul.f32 %v683, 0.999
        %v748 = vmul.f32 %v684, 0.999
        %v749 = vmul.f32 %v685, 0.999
        %v750 = vmul.f32 %v686, 0.999
        %v751 = vmul.f32 %v687, 0.999
        %v752 = vmul.f32 %v527, 0.001
        %v753 = vmul.f32 %v528, 0.001
        %v754 = vmul.f32 %v529, 0.001
        %v755 = vmul.f32 %v530, 0.001
        %v756 = vmul.f32 %v531, 0.001
        %v757 = vmul.f32 %v532, 0.001
        %v758 = vmul.f32 %v533, 0.001
        %v759 = vmul.f32 %v534, 0.001
        %v760 = vmul.f32 %v535, 0.001
        %v761 = vmul.f32 %v536, 0.001
        %v762 = vmul.f32 %v537, 0.001
        %v763 = vmul.f32 %v538, 0.001
        %v764 = vmul.f32 %v539, 0.001
        %v765 = vmul.f32 %v540, 0.001
        %v766 = vmul.f32 %v541, 0.001
        %v767 = vmul.f32 %v542, 0.001
        %v768 = vmul.f32 %v543, 0.001
        %v769 = vmul.f32 %v544, 0.001
        %v770 = vmul.f32 %v545, 0.001
        %v771 = vmul.f32 %v546, 0.001
        %v772 = vmul.f32 %v547, 0.001
        %v773 = vmul.f32 %v548, 0.001
        %v774 = vmul.f32 %v549, 0.001
        %v775 = vmul.f32 %v550, 0.001
        %v776 = vmul.f32 %v551, 0.001
        %v777 = vmul.f32 %v552, 0.001
        %v778 = vmul.f32 %v553, 0.001
        %v779 = vmul.f32 %v554, 0.001
        %v780 = vmul.f32 %v555, 0.001
        %v781 = vmul.f32 %v556, 0.001
        %v782 = vmul.f32 %v557, 0.001
        %v783 = vmul.f32 %v558, 0.001
        %v784 = vmul.f32 %v559, 0.001
        %v785 = vmul.f32 %v560, 0.001
        %v786 = vmul.f32 %v561, 0.001
        %v787 = vmul.f32 %v562, 0.001
        %v788 = vmul.f32 %v563, 0.001
        %v789 = vmul.f32 %v564, 0.001
        %v790 = vmul.f32 %v565, 0.001
        %v791 = vmul.f32 %v566, 0.001
        %v792 = vmul.f32 %v567, 0.001
        %v793 = vmul.f32 %v568, 0.001
        %v794 = vmul.f32 %v569, 0.001
        %v795 = vmul.f32 %v570, 0.001
        %v796 = vmul.f32 %v571, 0.001
        %v797 = vmul.f32 %v572, 0.001
        %v798 = vmul.f32 %v573, 0.001
        %v799 = vmul.f32 %v574, 0.001
        %v800 = vmul.f32 %v575, 0.001
        %v801 = vmul.f32 %v576, 0.001
        %v802 = vmul.f32 %v577, 0.001
        %v803 = vmul.f32 %v578, 0.001
        %v804 = vmul.f32 %v579, 0.001
        %v805 = vmul.f32 %v580, 0.001
        %v806 = vmul.f32 %v581, 0.001
        %v807 = vmul.f32 %v582, 0.001
        %v808 = vmul.f32 %v583, 0.001
        %v809 = vmul.f32 %v584, 0.001
        %v810 = vmul.f32 %v585, 0.001
        %v811 = vmul.f32 %v586, 0.001
        %v812 = vmul.f32 %v587, 0.001
        %v813 = vmul.f32 %v588, 0.001
        %v814 = vmul.f32 %v589, 0.001
        %v815 = vmul.f32 %v590, 0.001
        %v816 = vadd.f32 %v688, %v752
        %v817 = vadd.f32 %v689, %v753
        %v818 = vadd.f32 %v690, %v754
        %v819 = vadd.f32 %v691, %v755
        %v820 = vadd.f32 %v692, %v756
        %v821 = vadd.f32 %v693, %v757
        %v822 = vadd.f32 %v694, %v758
        %v823 = vadd.f32 %v695, %v759
        %v824 = vadd.f32 %v696, %v760
        %v825 = vadd.f32 %v697, %v761
        %v826 = vadd.f32 %v698, %v762
        %v827 = vadd.f32 %v699, %v763
        %v828 = vadd.f32 %v700, %v764
        %v829 = vadd.f32 %v701, %v765
        %v830 = vadd.f32 %v702, %v766
        %v831 = vadd.f32 %v703, %v767
        %v832 = vadd.f32 %v704, %v768
        %v833 = vadd.f32 %v705, %v769
        %v834 = vadd.f32 %v706, %v770
        %v835 = vadd.f32 %v707, %v771
        %v836 = vadd.f32 %v708, %v772
        %v837 = vadd.f32 %v709, %v773
        %v838 = vadd.f32 %v710, %v774
        %v839 = vadd.f32 %v711, %v775
        %v840 = vadd.f32 %v712, %v776
        %v841 = vadd.f32 %v713, %v777
        %v842 = vadd.f32 %v714, %v778
        %v843 = vadd.f32 %v715, %v779
        %v844 = vadd.f32 %v716, %v780
        %v845 = vadd.f32 %v717, %v781
        %v846 = vadd.f32 %v718, %v782
        %v847 = vadd.f32 %v719, %v783
        %v848 = vadd.f32 %v720, %v784
        %v849 = vadd.f32 %v721, %v785
        %v850 = vadd.f32 %v722, %v786
        %v851 = vadd.f32 %v723, %v787
        %v852 = vadd.f32 %v724, %v788
        %v853 = vadd.f32 %v725, %v789
        %v854 = vadd.f32 %v726, %v790
        %v855 = vadd.f32 %v727, %v791
        %v856 = vadd.f32 %v728, %v792
        %v857 = vadd.f32 %v729, %v793
        %v858 = vadd.f32 %v730, %v794
        %v859 = vadd.f32 %v731, %v795
        %v860 = vadd.f32 %v732, %v796
        %v861 = vadd.f32 %v733, %v797
        %v862 = vadd.f32 %v734, %v798
        %v863 = vadd.f32 %v735, %v799
        %v864 = vadd.f32 %v736, %v800
        %v865 = vadd.f32 %v737, %v801
        %v866 = vadd.f32 %v738, %v802
        %v867 = vadd.f32 %v739, %v803
        %v868 = vadd.f32 %v740, %v804
        %v869 = vadd.f32 %v741, %v805
        %v870 = vadd.f32 %v742, %v806
        %v871 = vadd.f32 %v743, %v807
        %v872 = vadd.f32 %v744, %v808
        %v873 = vadd.f32 %v745, %v809
        %v874 = vadd.f32 %v746, %v810
        %v875 = vadd.f32 %v747, %v811
        %v876 = vadd.f32 %v748, %v812
        %v877 = vadd.f32 %v749, %v813
        %v878 = vadd.f32 %v750, %v814
        %v879 = vadd.f32 %v751, %v815
        %v880 = vpack.c.bf16 %v818, %v816
        %v881 = vpack.c.bf16 %v819, %v817
        %v882 = vpack.c.bf16 %v822, %v820
        %v883 = vpack.c.bf16 %v823, %v821
        %v884 = vpack.c.bf16 %v826, %v824
        %v885 = vpack.c.bf16 %v827, %v825
        %v886 = vpack.c.bf16 %v830, %v828
        %v887 = vpack.c.bf16 %v831, %v829
        %v888 = vpack.c.bf16 %v834, %v832
        %v889 = vpack.c.bf16 %v835, %v833
        %v890 = vpack.c.bf16 %v838, %v836
        %v891 = vpack.c.bf16 %v839, %v837
        %v892 = vpack.c.bf16 %v842, %v840
        %v893 = vpack.c.bf16 %v843, %v841
        %v894 = vpack.c.bf16 %v846, %v844
        %v895 = vpack.c.bf16 %v847, %v845
        %v896 = vpack.c.bf16 %v850, %v848
        %v897 = vpack.c.bf16 %v851, %v849
        %v898 = vpack.c.bf16 %v854, %v852
        %v899 = vpack.c.bf16 %v855, %v853
        %v900 = vpack.c.bf16 %v858, %v856
        %v901 = vpack.c.bf16 %v859, %v857
        %v902 = vpack.c.bf16 %v862, %v860
        %v903 = vpack.c.bf16 %v863, %v861
        %v904 = vpack.c.bf16 %v866, %v864
        %v905 = vpack.c.bf16 %v867, %v865
        %v906 = vpack.c.bf16 %v870, %v868
        %v907 = vpack.c.bf16 %v871, %v869
        %v908 = vpack.c.bf16 %v874, %v872
        %v909 = vpack.c.bf16 %v875, %v873
        %v910 = vpack.c.bf16 %v878, %v876
        %v911 = vpack.c.bf16 %v879, %v877
        %v944 = vunpack.c.l.b16 %v880
        %v945 = vunpack.c.l.b16 %v881
        %v946 = vunpack.c.h.b16 %v880
        %v947 = vunpack.c.h.b16 %v881
        %v948 = vunpack.c.l.b16 %v882
        %v949 = vunpack.c.l.b16 %v883
        %v950 = vunpack.c.h.b16 %v882
        %v951 = vunpack.c.h.b16 %v883
        %v952 = vunpack.c.l.b16 %v884
        %v953 = vunpack.c.l.b16 %v885
        %v954 = vunpack.c.h.b16 %v884
        %v955 = vunpack.c.h.b16 %v885
        %v956 = vunpack.c.l.b16 %v886
        %v957 = vunpack.c.l.b16 %v887
        %v958 = vunpack.c.h.b16 %v886
        %v959 = vunpack.c.h.b16 %v887
        %v960 = vunpack.c.l.b16 %v888
        %v961 = vunpack.c.l.b16 %v889
        %v962 = vunpack.c.h.b16 %v888
        %v963 = vunpack.c.h.b16 %v889
        %v964 = vunpack.c.l.b16 %v890
        %v965 = vunpack.c.l.b16 %v891
        %v966 = vunpack.c.h.b16 %v890
        %v967 = vunpack.c.h.b16 %v891
        %v968 = vunpack.c.l.b16 %v892
        %v969 = vunpack.c.l.b16 %v893
        %v970 = vunpack.c.h.b16 %v892
        %v971 = vunpack.c.h.b16 %v893
        %v972 = vunpack.c.l.b16 %v894
        %v973 = vunpack.c.l.b16 %v895
        %v974 = vunpack.c.h.b16 %v894
        %v975 = vunpack.c.h.b16 %v895
        %v976 = vunpack.c.l.b16 %v896
        %v977 = vunpack.c.l.b16 %v897
        %v978 = vunpack.c.h.b16 %v896
        %v979 = vunpack.c.h.b16 %v897
        %v980 = vunpack.c.l.b16 %v898
        %v981 = vunpack.c.l.b16 %v899
        %v982 = vunpack.c.h.b16 %v898
        %v983 = vunpack.c.h.b16 %v899
        %v984 = vunpack.c.l.b16 %v900
        %v985 = vunpack.c.l.b16 %v901
        %v986 = vunpack.c.h.b16 %v900
        %v987 = vunpack.c.h.b16 %v901
        %v988 = vunpack.c.l.b16 %v902
        %v989 = vunpack.c.l.b16 %v903
        %v990 = vunpack.c.h.b16 %v902
        %v991 = vunpack.c.h.b16 %v903
        %v992 = vunpack.c.l.b16 %v904
        %v993 = vunpack.c.l.b16 %v905
        %v994 = vunpack.c.h.b16 %v904
        %v995 = vunpack.c.h.b16 %v905
        %v996 = vunpack.c.l.b16 %v906
        %v997 = vunpack.c.l.b16 %v907
        %v998 = vunpack.c.h.b16 %v906
        %v999 = vunpack.c.h.b16 %v907
        %v1000 = vunpack.c.l.b16 %v908
        %v1001 = vunpack.c.l.b16 %v909
        %v1002 = vunpack.c.h.b16 %v908
        %v1003 = vunpack.c.h.b16 %v909
        %v1004 = vunpack.c.l.b16 %v910
        %v1005 = vunpack.c.l.b16 %v911
        %v1006 = vunpack.c.h.b16 %v910
        %v1007 = vunpack.c.h.b16 %v911
        %v1008 = vpack.c.b16 %v945, %v944
        %v1009 = vpack.c.b16 %v947, %v946
        %v1010 = vpack.c.b16 %v949, %v948
        %v1011 = vpack.c.b16 %v951, %v950
        %v1012 = vpack.c.b16 %v953, %v952
        %v1013 = vpack.c.b16 %v955, %v954
        %v1014 = vpack.c.b16 %v957, %v956
        %v1015 = vpack.c.b16 %v959, %v958
        %v1016 = vpack.c.b16 %v961, %v960
        %v1017 = vpack.c.b16 %v963, %v962
        %v1018 = vpack.c.b16 %v965, %v964
        %v1019 = vpack.c.b16 %v967, %v966
        %v1020 = vpack.c.b16 %v969, %v968
        %v1021 = vpack.c.b16 %v971, %v970
        %v1022 = vpack.c.b16 %v973, %v972
        %v1023 = vpack.c.b16 %v975, %v974
        %v1024 = vpack.c.b16 %v977, %v976
        %v1025 = vpack.c.b16 %v979, %v978
        %v1026 = vpack.c.b16 %v981, %v980
        %v1027 = vpack.c.b16 %v983, %v982
        %v1028 = vpack.c.b16 %v985, %v984
        %v1029 = vpack.c.b16 %v987, %v986
        %v1030 = vpack.c.b16 %v989, %v988
        %v1031 = vpack.c.b16 %v991, %v990
        %v1032 = vpack.c.b16 %v993, %v992
        %v1033 = vpack.c.b16 %v995, %v994
        %v1034 = vpack.c.b16 %v997, %v996
        %v1035 = vpack.c.b16 %v999, %v998
        %v1036 = vpack.c.b16 %v1001, %v1000
        %v1037 = vpack.c.b16 %v1003, %v1002
        %v1038 = vpack.c.b16 %v1005, %v1004
        %v1039 = vpack.c.b16 %v1007, %v1006
        %1072 = vst [vmem:[%s482] sm:$0xff] %v1008
        %1073 = vst [vmem:[%s482 + $0x8] sm:$0xff] %v1009
        %1074 = vst [vmem:[%s482 + $0x10] sm:$0xff] %v1010
        %1075 = vst [vmem:[%s482 + $0x18] sm:$0xff] %v1011
        %1076 = vst [vmem:[%s482 + $0x20] sm:$0xff] %v1012
        %1077 = vst [vmem:[%s482 + $0x28] sm:$0xff] %v1013
        %1078 = vst [vmem:[%s482 + $0x30] sm:$0xff] %v1014
        %1079 = vst [vmem:[%s482 + $0x38] sm:$0xff] %v1015
        %1080 = vst [vmem:[%s482 + $0x40] sm:$0xff] %v1016
        %1081 = vst [vmem:[%s482 + $0x48] sm:$0xff] %v1017
        %1082 = vst [vmem:[%s482 + $0x50] sm:$0xff] %v1018
        %1083 = vst [vmem:[%s482 + $0x58] sm:$0xff] %v1019
        %1084 = vst [vmem:[%s482 + $0x60] sm:$0xff] %v1020
        %1085 = vst [vmem:[%s482 + $0x68] sm:$0xff] %v1021
        %1086 = vst [vmem:[%s482 + $0x70] sm:$0xff] %v1022
        %1087 = vst [vmem:[%s482 + $0x78] sm:$0xff] %v1023
        %1088 = vst [vmem:[%s482 + $0x80] sm:$0xff] %v1024
        %1089 = vst [vmem:[%s482 + $0x88] sm:$0xff] %v1025
        %1090 = vst [vmem:[%s482 + $0x90] sm:$0xff] %v1026
        %1091 = vst [vmem:[%s482 + $0x98] sm:$0xff] %v1027
        %1092 = vst [vmem:[%s482 + $0xa0] sm:$0xff] %v1028
        %1093 = vst [vmem:[%s482 + $0xa8] sm:$0xff] %v1029
        %1094 = vst [vmem:[%s482 + $0xb0] sm:$0xff] %v1030
        %1095 = vst [vmem:[%s482 + $0xb8] sm:$0xff] %v1031
        %1096 = vst [vmem:[%s482 + $0xc0] sm:$0xff] %v1032
        %1097 = vst [vmem:[%s482 + $0xc8] sm:$0xff] %v1033
        %1098 = vst [vmem:[%s482 + $0xd0] sm:$0xff] %v1034
        %1099 = vst [vmem:[%s482 + $0xd8] sm:$0xff] %v1035
        %1100 = vst [vmem:[%s482 + $0xe0] sm:$0xff] %v1036
        %1101 = vst [vmem:[%s482 + $0xe8] sm:$0xff] %v1037
        %1102 = vst [vmem:[%s482 + $0xf0] sm:$0xff] %v1038
        %1103 = vst [vmem:[%s482 + $0xf8] sm:$0xff] %v1039
        %v1104 = vld [vmem:[#allocation5] sm:$0x3]
        %s1105 = scalar_lea.vmem [#allocation5], 2
        %v1106 = vld [vmem:[%s1105] sm:$0x3]
        %v1107 = vmul.f32 %v1106, 0.999
        %v1108 = vmul.f32 %v1104, 0.001
        %v1109 = vadd.f32 %v1107, %v1108
        %v1110 = vlaneseq
        %vm1111 = vcmp.ge.s32.totalorder %v1110, 0
        %vm1112 = vcmp.lt.s32.totalorder %v1110, 256
        %vm1113 = vmand %vm1111, %vm1112
        %1114 = vst.msk [vmem:[#allocation14] sm:$0x3] %vm1113, %v1109
        %v1115 = vld [vmem:[#allocation7] sm:$0xff]
        %v1116 = vld [vmem:[#allocation7 + $0x8] sm:$0xff]
        %v1117 = vld [vmem:[#allocation7 + $0x10] sm:$0xff]
        %v1118 = vld [vmem:[#allocation7 + $0x18] sm:$0xff]
        %v1119 = vld [vmem:[#allocation7 + $0x20] sm:$0xff]
        %v1120 = vld [vmem:[#allocation7 + $0x28] sm:$0xff]
        %v1121 = vld [vmem:[#allocation7 + $0x30] sm:$0xff]
        %v1122 = vld [vmem:[#allocation7 + $0x38] sm:$0xff]
        %v1123 = vld [vmem:[#allocation7 + $0x40] sm:$0xff]
        %v1124 = vld [vmem:[#allocation7 + $0x48] sm:$0xff]
        %v1125 = vld [vmem:[#allocation7 + $0x50] sm:$0xff]
        %v1126 = vld [vmem:[#allocation7 + $0x58] sm:$0xff]
        %v1127 = vld [vmem:[#allocation7 + $0x60] sm:$0xff]
        %v1128 = vld [vmem:[#allocation7 + $0x68] sm:$0xff]
        %v1129 = vld [vmem:[#allocation7 + $0x70] sm:$0xff]
        %v1130 = vld [vmem:[#allocation7 + $0x78] sm:$0xff]
        %v1131 = vld [vmem:[#allocation7 + $0x80] sm:$0xff]
        %v1132 = vld [vmem:[#allocation7 + $0x88] sm:$0xff]
        %v1133 = vld [vmem:[#allocation7 + $0x90] sm:$0xff]
        %v1134 = vld [vmem:[#allocation7 + $0x98] sm:$0xff]
        %v1135 = vld [vmem:[#allocation7 + $0xa0] sm:$0xff]
        %v1136 = vld [vmem:[#allocation7 + $0xa8] sm:$0xff]
        %v1137 = vld [vmem:[#allocation7 + $0xb0] sm:$0xff]
        %v1138 = vld [vmem:[#allocation7 + $0xb8] sm:$0xff]
        %v1139 = vld [vmem:[#allocation7 + $0xc0] sm:$0xff]
        %v1140 = vld [vmem:[#allocation7 + $0xc8] sm:$0xff]
        %v1141 = vld [vmem:[#allocation7 + $0xd0] sm:$0xff]
        %v1142 = vld [vmem:[#allocation7 + $0xd8] sm:$0xff]
        %v1143 = vld [vmem:[#allocation7 + $0xe0] sm:$0xff]
        %v1144 = vld [vmem:[#allocation7 + $0xe8] sm:$0xff]
        %v1145 = vld [vmem:[#allocation7 + $0xf0] sm:$0xff]
        %v1146 = vld [vmem:[#allocation7 + $0xf8] sm:$0xff]
        %v1147 = vunpack.c.l.bf16 %v1115
        %v1148 = vunpack.c.h.bf16 %v1115
        %v1149 = vunpack.c.l.bf16 %v1116
        %v1150 = vunpack.c.h.bf16 %v1116
        %v1151 = vunpack.c.l.bf16 %v1117
        %v1152 = vunpack.c.h.bf16 %v1117
        %v1153 = vunpack.c.l.bf16 %v1118
        %v1154 = vunpack.c.h.bf16 %v1118
        %v1155 = vunpack.c.l.bf16 %v1119
        %v1156 = vunpack.c.h.bf16 %v1119
        %v1157 = vunpack.c.l.bf16 %v1120
        %v1158 = vunpack.c.h.bf16 %v1120
        %v1159 = vunpack.c.l.bf16 %v1121
        %v1160 = vunpack.c.h.bf16 %v1121
        %v1161 = vunpack.c.l.bf16 %v1122
        %v1162 = vunpack.c.h.bf16 %v1122
        %v1163 = vunpack.c.l.bf16 %v1123
        %v1164 = vunpack.c.h.bf16 %v1123
        %v1165 = vunpack.c.l.bf16 %v1124
        %v1166 = vunpack.c.h.bf16 %v1124
        %v1167 = vunpack.c.l.bf16 %v1125
        %v1168 = vunpack.c.h.bf16 %v1125
        %v1169 = vunpack.c.l.bf16 %v1126
        %v1170 = vunpack.c.h.bf16 %v1126
        %v1171 = vunpack.c.l.bf16 %v1127
        %v1172 = vunpack.c.h.bf16 %v1127
        %v1173 = vunpack.c.l.bf16 %v1128
        %v1174 = vunpack.c.h.bf16 %v1128
        %v1175 = vunpack.c.l.bf16 %v1129
        %v1176 = vunpack.c.h.bf16 %v1129
        %v1177 = vunpack.c.l.bf16 %v1130
        %v1178 = vunpack.c.h.bf16 %v1130
        %v1179 = vunpack.c.l.bf16 %v1131
        %v1180 = vunpack.c.h.bf16 %v1131
        %v1181 = vunpack.c.l.bf16 %v1132
        %v1182 = vunpack.c.h.bf16 %v1132
        %v1183 = vunpack.c.l.bf16 %v1133
        %v1184 = vunpack.c.h.bf16 %v1133
        %v1185 = vunpack.c.l.bf16 %v1134
        %v1186 = vunpack.c.h.bf16 %v1134
        %v1187 = vunpack.c.l.bf16 %v1135
        %v1188 = vunpack.c.h.bf16 %v1135
        %v1189 = vunpack.c.l.bf16 %v1136
        %v1190 = vunpack.c.h.bf16 %v1136
        %v1191 = vunpack.c.l.bf16 %v1137
        %v1192 = vunpack.c.h.bf16 %v1137
        %v1193 = vunpack.c.l.bf16 %v1138
        %v1194 = vunpack.c.h.bf16 %v1138
        %v1195 = vunpack.c.l.bf16 %v1139
        %v1196 = vunpack.c.h.bf16 %v1139
        %v1197 = vunpack.c.l.bf16 %v1140
        %v1198 = vunpack.c.h.bf16 %v1140
        %v1199 = vunpack.c.l.bf16 %v1141
        %v1200 = vunpack.c.h.bf16 %v1141
        %v1201 = vunpack.c.l.bf16 %v1142
        %v1202 = vunpack.c.h.bf16 %v1142
        %v1203 = vunpack.c.l.bf16 %v1143
        %v1204 = vunpack.c.h.bf16 %v1143
        %v1205 = vunpack.c.l.bf16 %v1144
        %v1206 = vunpack.c.h.bf16 %v1144
        %v1207 = vunpack.c.l.bf16 %v1145
        %v1208 = vunpack.c.h.bf16 %v1145
        %v1209 = vunpack.c.l.bf16 %v1146
        %v1210 = vunpack.c.h.bf16 %v1146
        %s1211 = scalar_lea.vmem [#allocation7], 256
        %v1212 = vld [vmem:[%s1211] sm:$0xff]
        %v1213 = vld [vmem:[%s1211 + $0x8] sm:$0xff]
        %v1214 = vld [vmem:[%s1211 + $0x10] sm:$0xff]
        %v1215 = vld [vmem:[%s1211 + $0x18] sm:$0xff]
        %v1216 = vld [vmem:[%s1211 + $0x20] sm:$0xff]
        %v1217 = vld [vmem:[%s1211 + $0x28] sm:$0xff]
        %v1218 = vld [vmem:[%s1211 + $0x30] sm:$0xff]
        %v1219 = vld [vmem:[%s1211 + $0x38] sm:$0xff]
        %v1220 = vld [vmem:[%s1211 + $0x40] sm:$0xff]
        %v1221 = vld [vmem:[%s1211 + $0x48] sm:$0xff]
        %v1222 = vld [vmem:[%s1211 + $0x50] sm:$0xff]
        %v1223 = vld [vmem:[%s1211 + $0x58] sm:$0xff]
        %v1224 = vld [vmem:[%s1211 + $0x60] sm:$0xff]
        %v1225 = vld [vmem:[%s1211 + $0x68] sm:$0xff]
        %v1226 = vld [vmem:[%s1211 + $0x70] sm:$0xff]
        %v1227 = vld [vmem:[%s1211 + $0x78] sm:$0xff]
        %v1228 = vld [vmem:[%s1211 + $0x80] sm:$0xff]
        %v1229 = vld [vmem:[%s1211 + $0x88] sm:$0xff]
        %v1230 = vld [vmem:[%s1211 + $0x90] sm:$0xff]
        %v1231 = vld [vmem:[%s1211 + $0x98] sm:$0xff]
        %v1232 = vld [vmem:[%s1211 + $0xa0] sm:$0xff]
        %v1233 = vld [vmem:[%s1211 + $0xa8] sm:$0xff]
        %v1234 = vld [vmem:[%s1211 + $0xb0] sm:$0xff]
        %v1235 = vld [vmem:[%s1211 + $0xb8] sm:$0xff]
        %v1236 = vld [vmem:[%s1211 + $0xc0] sm:$0xff]
        %v1237 = vld [vmem:[%s1211 + $0xc8] sm:$0xff]
        %v1238 = vld [vmem:[%s1211 + $0xd0] sm:$0xff]
        %v1239 = vld [vmem:[%s1211 + $0xd8] sm:$0xff]
        %v1240 = vld [vmem:[%s1211 + $0xe0] sm:$0xff]
        %v1241 = vld [vmem:[%s1211 + $0xe8] sm:$0xff]
        %v1242 = vld [vmem:[%s1211 + $0xf0] sm:$0xff]
        %v1243 = vld [vmem:[%s1211 + $0xf8] sm:$0xff]
        %v1244 = vunpack.c.l.bf16 %v1212
        %v1245 = vunpack.c.h.bf16 %v1212
        %v1246 = vunpack.c.l.bf16 %v1213
        %v1247 = vunpack.c.h.bf16 %v1213
        %v1248 = vunpack.c.l.bf16 %v1214
        %v1249 = vunpack.c.h.bf16 %v1214
        %v1250 = vunpack.c.l.bf16 %v1215
        %v1251 = vunpack.c.h.bf16 %v1215
        %v1252 = vunpack.c.l.bf16 %v1216
        %v1253 = vunpack.c.h.bf16 %v1216
        %v1254 = vunpack.c.l.bf16 %v1217
        %v1255 = vunpack.c.h.bf16 %v1217
        %v1256 = vunpack.c.l.bf16 %v1218
        %v1257 = vunpack.c.h.bf16 %v1218
        %v1258 = vunpack.c.l.bf16 %v1219
        %v1259 = vunpack.c.h.bf16 %v1219
        %v1260 = vunpack.c.l.bf16 %v1220
        %v1261 = vunpack.c.h.bf16 %v1220
        %v1262 = vunpack.c.l.bf16 %v1221
        %v1263 = vunpack.c.h.bf16 %v1221
        %v1264 = vunpack.c.l.bf16 %v1222
        %v1265 = vunpack.c.h.bf16 %v1222
        %v1266 = vunpack.c.l.bf16 %v1223
        %v1267 = vunpack.c.h.bf16 %v1223
        %v1268 = vunpack.c.l.bf16 %v1224
        %v1269 = vunpack.c.h.bf16 %v1224
        %v1270 = vunpack.c.l.bf16 %v1225
        %v1271 = vunpack.c.h.bf16 %v1225
        %v1272 = vunpack.c.l.bf16 %v1226
        %v1273 = vunpack.c.h.bf16 %v1226
        %v1274 = vunpack.c.l.bf16 %v1227
        %v1275 = vunpack.c.h.bf16 %v1227
        %v1276 = vunpack.c.l.bf16 %v1228
        %v1277 = vunpack.c.h.bf16 %v1228
        %v1278 = vunpack.c.l.bf16 %v1229
        %v1279 = vunpack.c.h.bf16 %v1229
        %v1280 = vunpack.c.l.bf16 %v1230
        %v1281 = vunpack.c.h.bf16 %v1230
        %v1282 = vunpack.c.l.bf16 %v1231
        %v1283 = vunpack.c.h.bf16 %v1231
        %v1284 = vunpack.c.l.bf16 %v1232
        %v1285 = vunpack.c.h.bf16 %v1232
        %v1286 = vunpack.c.l.bf16 %v1233
        %v1287 = vunpack.c.h.bf16 %v1233
        %v1288 = vunpack.c.l.bf16 %v1234
        %v1289 = vunpack.c.h.bf16 %v1234
        %v1290 = vunpack.c.l.bf16 %v1235
        %v1291 = vunpack.c.h.bf16 %v1235
        %v1292 = vunpack.c.l.bf16 %v1236
        %v1293 = vunpack.c.h.bf16 %v1236
        %v1294 = vunpack.c.l.bf16 %v1237
        %v1295 = vunpack.c.h.bf16 %v1237
        %v1296 = vunpack.c.l.bf16 %v1238
        %v1297 = vunpack.c.h.bf16 %v1238
        %v1298 = vunpack.c.l.bf16 %v1239
        %v1299 = vunpack.c.h.bf16 %v1239
        %v1300 = vunpack.c.l.bf16 %v1240
        %v1301 = vunpack.c.h.bf16 %v1240
        %v1302 = vunpack.c.l.bf16 %v1241
        %v1303 = vunpack.c.h.bf16 %v1241
        %v1304 = vunpack.c.l.bf16 %v1242
        %v1305 = vunpack.c.h.bf16 %v1242
        %v1306 = vunpack.c.l.bf16 %v1243
        %v1307 = vunpack.c.h.bf16 %v1243
        %v1308 = vmul.f32 %v1244, 0.999
        %v1309 = vmul.f32 %v1245, 0.999
        %v1310 = vmul.f32 %v1246, 0.999
        %v1311 = vmul.f32 %v1247, 0.999
        %v1312 = vmul.f32 %v1248, 0.999
        %v1313 = vmul.f32 %v1249, 0.999
        %v1314 = vmul.f32 %v1250, 0.999
        %v1315 = vmul.f32 %v1251, 0.999
        %v1316 = vmul.f32 %v1252, 0.999
        %v1317 = vmul.f32 %v1253, 0.999
        %v1318 = vmul.f32 %v1254, 0.999
        %v1319 = vmul.f32 %v1255, 0.999
        %v1320 = vmul.f32 %v1256, 0.999
        %v1321 = vmul.f32 %v1257, 0.999
        %v1322 = vmul.f32 %v1258, 0.999
        %v1323 = vmul.f32 %v1259, 0.999
        %v1324 = vmul.f32 %v1260, 0.999
        %v1325 = vmul.f32 %v1261, 0.999
        %v1326 = vmul.f32 %v1262, 0.999
        %v1327 = vmul.f32 %v1263, 0.999
        %v1328 = vmul.f32 %v1264, 0.999
        %v1329 = vmul.f32 %v1265, 0.999
        %v1330 = vmul.f32 %v1266, 0.999
        %v1331 = vmul.f32 %v1267, 0.999
        %v1332 = vmul.f32 %v1268, 0.999
        %v1333 = vmul.f32 %v1269, 0.999
        %v1334 = vmul.f32 %v1270, 0.999
        %v1335 = vmul.f32 %v1271, 0.999
        %v1336 = vmul.f32 %v1272, 0.999
        %v1337 = vmul.f32 %v1273, 0.999
        %v1338 = vmul.f32 %v1274, 0.999
        %v1339 = vmul.f32 %v1275, 0.999
        %v1340 = vmul.f32 %v1276, 0.999
        %v1341 = vmul.f32 %v1277, 0.999
        %v1342 = vmul.f32 %v1278, 0.999
        %v1343 = vmul.f32 %v1279, 0.999
        %v1344 = vmul.f32 %v1280, 0.999
        %v1345 = vmul.f32 %v1281, 0.999
        %v1346 = vmul.f32 %v1282, 0.999
        %v1347 = vmul.f32 %v1283, 0.999
        %v1348 = vmul.f32 %v1284, 0.999
        %v1349 = vmul.f32 %v1285, 0.999
        %v1350 = vmul.f32 %v1286, 0.999
        %v1351 = vmul.f32 %v1287, 0.999
        %v1352 = vmul.f32 %v1288, 0.999
        %v1353 = vmul.f32 %v1289, 0.999
        %v1354 = vmul.f32 %v1290, 0.999
        %v1355 = vmul.f32 %v1291, 0.999
        %v1356 = vmul.f32 %v1292, 0.999
        %v1357 = vmul.f32 %v1293, 0.999
        %v1358 = vmul.f32 %v1294, 0.999
        %v1359 = vmul.f32 %v1295, 0.999
        %v1360 = vmul.f32 %v1296, 0.999
        %v1361 = vmul.f32 %v1297, 0.999
        %v1362 = vmul.f32 %v1298, 0.999
        %v1363 = vmul.f32 %v1299, 0.999
        %v1364 = vmul.f32 %v1300, 0.999
        %v1365 = vmul.f32 %v1301, 0.999
        %v1366 = vmul.f32 %v1302, 0.999
        %v1367 = vmul.f32 %v1303, 0.999
        %v1368 = vmul.f32 %v1304, 0.999
        %v1369 = vmul.f32 %v1305, 0.999
        %v1370 = vmul.f32 %v1306, 0.999
        %v1371 = vmul.f32 %v1307, 0.999
        %v1372 = vmul.f32 %v1147, 0.001
        %v1373 = vmul.f32 %v1148, 0.001
        %v1374 = vmul.f32 %v1149, 0.001
        %v1375 = vmul.f32 %v1150, 0.001
        %v1376 = vmul.f32 %v1151, 0.001
        %v1377 = vmul.f32 %v1152, 0.001
        %v1378 = vmul.f32 %v1153, 0.001
        %v1379 = vmul.f32 %v1154, 0.001
        %v1380 = vmul.f32 %v1155, 0.001
        %v1381 = vmul.f32 %v1156, 0.001
        %v1382 = vmul.f32 %v1157, 0.001
        %v1383 = vmul.f32 %v1158, 0.001
        %v1384 = vmul.f32 %v1159, 0.001
        %v1385 = vmul.f32 %v1160, 0.001
        %v1386 = vmul.f32 %v1161, 0.001
        %v1387 = vmul.f32 %v1162, 0.001
        %v1388 = vmul.f32 %v1163, 0.001
        %v1389 = vmul.f32 %v1164, 0.001
        %v1390 = vmul.f32 %v1165, 0.001
        %v1391 = vmul.f32 %v1166, 0.001
        %v1392 = vmul.f32 %v1167, 0.001
        %v1393 = vmul.f32 %v1168, 0.001
        %v1394 = vmul.f32 %v1169, 0.001
        %v1395 = vmul.f32 %v1170, 0.001
        %v1396 = vmul.f32 %v1171, 0.001
        %v1397 = vmul.f32 %v1172, 0.001
        %v1398 = vmul.f32 %v1173, 0.001
        %v1399 = vmul.f32 %v1174, 0.001
        %v1400 = vmul.f32 %v1175, 0.001
        %v1401 = vmul.f32 %v1176, 0.001
        %v1402 = vmul.f32 %v1177, 0.001
        %v1403 = vmul.f32 %v1178, 0.001
        %v1404 = vmul.f32 %v1179, 0.001
        %v1405 = vmul.f32 %v1180, 0.001
        %v1406 = vmul.f32 %v1181, 0.001
        %v1407 = vmul.f32 %v1182, 0.001
        %v1408 = vmul.f32 %v1183, 0.001
        %v1409 = vmul.f32 %v1184, 0.001
        %v1410 = vmul.f32 %v1185, 0.001
        %v1411 = vmul.f32 %v1186, 0.001
        %v1412 = vmul.f32 %v1187, 0.001
        %v1413 = vmul.f32 %v1188, 0.001
        %v1414 = vmul.f32 %v1189, 0.001
        %v1415 = vmul.f32 %v1190, 0.001
        %v1416 = vmul.f32 %v1191, 0.001
        %v1417 = vmul.f32 %v1192, 0.001
        %v1418 = vmul.f32 %v1193, 0.001
        %v1419 = vmul.f32 %v1194, 0.001
        %v1420 = vmul.f32 %v1195, 0.001
        %v1421 = vmul.f32 %v1196, 0.001
        %v1422 = vmul.f32 %v1197, 0.001
        %v1423 = vmul.f32 %v1198, 0.001
        %v1424 = vmul.f32 %v1199, 0.001
        %v1425 = vmul.f32 %v1200, 0.001
        %v1426 = vmul.f32 %v1201, 0.001
        %v1427 = vmul.f32 %v1202, 0.001
        %v1428 = vmul.f32 %v1203, 0.001
        %v1429 = vmul.f32 %v1204, 0.001
        %v1430 = vmul.f32 %v1205, 0.001
        %v1431 = vmul.f32 %v1206, 0.001
        %v1432 = vmul.f32 %v1207, 0.001
        %v1433 = vmul.f32 %v1208, 0.001
        %v1434 = vmul.f32 %v1209, 0.001
        %v1435 = vmul.f32 %v1210, 0.001
        %v1436 = vadd.f32 %v1308, %v1372
        %v1437 = vadd.f32 %v1309, %v1373
        %v1438 = vadd.f32 %v1310, %v1374
        %v1439 = vadd.f32 %v1311, %v1375
        %v1440 = vadd.f32 %v1312, %v1376
        %v1441 = vadd.f32 %v1313, %v1377
        %v1442 = vadd.f32 %v1314, %v1378
        %v1443 = vadd.f32 %v1315, %v1379
        %v1444 = vadd.f32 %v1316, %v1380
        %v1445 = vadd.f32 %v1317, %v1381
        %v1446 = vadd.f32 %v1318, %v1382
        %v1447 = vadd.f32 %v1319, %v1383
        %v1448 = vadd.f32 %v1320, %v1384
        %v1449 = vadd.f32 %v1321, %v1385
        %v1450 = vadd.f32 %v1322, %v1386
        %v1451 = vadd.f32 %v1323, %v1387
        %v1452 = vadd.f32 %v1324, %v1388
        %v1453 = vadd.f32 %v1325, %v1389
        %v1454 = vadd.f32 %v1326, %v1390
        %v1455 = vadd.f32 %v1327, %v1391
        %v1456 = vadd.f32 %v1328, %v1392
        %v1457 = vadd.f32 %v1329, %v1393
        %v1458 = vadd.f32 %v1330, %v1394
        %v1459 = vadd.f32 %v1331, %v1395
        %v1460 = vadd.f32 %v1332, %v1396
        %v1461 = vadd.f32 %v1333, %v1397
        %v1462 = vadd.f32 %v1334, %v1398
        %v1463 = vadd.f32 %v1335, %v1399
        %v1464 = vadd.f32 %v1336, %v1400
        %v1465 = vadd.f32 %v1337, %v1401
        %v1466 = vadd.f32 %v1338, %v1402
        %v1467 = vadd.f32 %v1339, %v1403
        %v1468 = vadd.f32 %v1340, %v1404
        %v1469 = vadd.f32 %v1341, %v1405
        %v1470 = vadd.f32 %v1342, %v1406
        %v1471 = vadd.f32 %v1343, %v1407
        %v1472 = vadd.f32 %v1344, %v1408
        %v1473 = vadd.f32 %v1345, %v1409
        %v1474 = vadd.f32 %v1346, %v1410
        %v1475 = vadd.f32 %v1347, %v1411
        %v1476 = vadd.f32 %v1348, %v1412
        %v1477 = vadd.f32 %v1349, %v1413
        %v1478 = vadd.f32 %v1350, %v1414
        %v1479 = vadd.f32 %v1351, %v1415
        %v1480 = vadd.f32 %v1352, %v1416
        %v1481 = vadd.f32 %v1353, %v1417
        %v1482 = vadd.f32 %v1354, %v1418
        %v1483 = vadd.f32 %v1355, %v1419
        %v1484 = vadd.f32 %v1356, %v1420
        %v1485 = vadd.f32 %v1357, %v1421
        %v1486 = vadd.f32 %v1358, %v1422
        %v1487 = vadd.f32 %v1359, %v1423
        %v1488 = vadd.f32 %v1360, %v1424
        %v1489 = vadd.f32 %v1361, %v1425
        %v1490 = vadd.f32 %v1362, %v1426
        %v1491 = vadd.f32 %v1363, %v1427
        %v1492 = vadd.f32 %v1364, %v1428
        %v1493 = vadd.f32 %v1365, %v1429
        %v1494 = vadd.f32 %v1366, %v1430
        %v1495 = vadd.f32 %v1367, %v1431
        %v1496 = vadd.f32 %v1368, %v1432
        %v1497 = vadd.f32 %v1369, %v1433
        %v1498 = vadd.f32 %v1370, %v1434
        %v1499 = vadd.f32 %v1371, %v1435
        %v1500 = vpack.c.bf16 %v1438, %v1436
        %v1501 = vpack.c.bf16 %v1439, %v1437
        %v1502 = vpack.c.bf16 %v1442, %v1440
        %v1503 = vpack.c.bf16 %v1443, %v1441
        %v1504 = vpack.c.bf16 %v1446, %v1444
        %v1505 = vpack.c.bf16 %v1447, %v1445
        %v1506 = vpack.c.bf16 %v1450, %v1448
        %v1507 = vpack.c.bf16 %v1451, %v1449
        %v1508 = vpack.c.bf16 %v1454, %v1452
        %v1509 = vpack.c.bf16 %v1455, %v1453
        %v1510 = vpack.c.bf16 %v1458, %v1456
        %v1511 = vpack.c.bf16 %v1459, %v1457
        %v1512 = vpack.c.bf16 %v1462, %v1460
        %v1513 = vpack.c.bf16 %v1463, %v1461
        %v1514 = vpack.c.bf16 %v1466, %v1464
        %v1515 = vpack.c.bf16 %v1467, %v1465
        %v1516 = vpack.c.bf16 %v1470, %v1468
        %v1517 = vpack.c.bf16 %v1471, %v1469
        %v1518 = vpack.c.bf16 %v1474, %v1472
        %v1519 = vpack.c.bf16 %v1475, %v1473
        %v1520 = vpack.c.bf16 %v1478, %v1476
        %v1521 = vpack.c.bf16 %v1479, %v1477
        %v1522 = vpack.c.bf16 %v1482, %v1480
        %v1523 = vpack.c.bf16 %v1483, %v1481
        %v1524 = vpack.c.bf16 %v1486, %v1484
        %v1525 = vpack.c.bf16 %v1487, %v1485
        %v1526 = vpack.c.bf16 %v1490, %v1488
        %v1527 = vpack.c.bf16 %v1491, %v1489
        %v1528 = vpack.c.bf16 %v1494, %v1492
        %v1529 = vpack.c.bf16 %v1495, %v1493
        %v1530 = vpack.c.bf16 %v1498, %v1496
        %v1531 = vpack.c.bf16 %v1499, %v1497
        %v1564 = vunpack.c.l.b16 %v1500
        %v1565 = vunpack.c.l.b16 %v1501
        %v1566 = vunpack.c.h.b16 %v1500
        %v1567 = vunpack.c.h.b16 %v1501
        %v1568 = vunpack.c.l.b16 %v1502
        %v1569 = vunpack.c.l.b16 %v1503
        %v1570 = vunpack.c.h.b16 %v1502
        %v1571 = vunpack.c.h.b16 %v1503
        %v1572 = vunpack.c.l.b16 %v1504
        %v1573 = vunpack.c.l.b16 %v1505
        %v1574 = vunpack.c.h.b16 %v1504
        %v1575 = vunpack.c.h.b16 %v1505
        %v1576 = vunpack.c.l.b16 %v1506
        %v1577 = vunpack.c.l.b16 %v1507
        %v1578 = vunpack.c.h.b16 %v1506
        %v1579 = vunpack.c.h.b16 %v1507
        %v1580 = vunpack.c.l.b16 %v1508
        %v1581 = vunpack.c.l.b16 %v1509
        %v1582 = vunpack.c.h.b16 %v1508
        %v1583 = vunpack.c.h.b16 %v1509
        %v1584 = vunpack.c.l.b16 %v1510
        %v1585 = vunpack.c.l.b16 %v1511
        %v1586 = vunpack.c.h.b16 %v1510
        %v1587 = vunpack.c.h.b16 %v1511
        %v1588 = vunpack.c.l.b16 %v1512
        %v1589 = vunpack.c.l.b16 %v1513
        %v1590 = vunpack.c.h.b16 %v1512
        %v1591 = vunpack.c.h.b16 %v1513
        %v1592 = vunpack.c.l.b16 %v1514
        %v1593 = vunpack.c.l.b16 %v1515
        %v1594 = vunpack.c.h.b16 %v1514
        %v1595 = vunpack.c.h.b16 %v1515
        %v1596 = vunpack.c.l.b16 %v1516
        %v1597 = vunpack.c.l.b16 %v1517
        %v1598 = vunpack.c.h.b16 %v1516
        %v1599 = vunpack.c.h.b16 %v1517
        %v1600 = vunpack.c.l.b16 %v1518
        %v1601 = vunpack.c.l.b16 %v1519
        %v1602 = vunpack.c.h.b16 %v1518
        %v1603 = vunpack.c.h.b16 %v1519
        %v1604 = vunpack.c.l.b16 %v1520
        %v1605 = vunpack.c.l.b16 %v1521
        %v1606 = vunpack.c.h.b16 %v1520
        %v1607 = vunpack.c.h.b16 %v1521
        %v1608 = vunpack.c.l.b16 %v1522
        %v1609 = vunpack.c.l.b16 %v1523
        %v1610 = vunpack.c.h.b16 %v1522
        %v1611 = vunpack.c.h.b16 %v1523
        %v1612 = vunpack.c.l.b16 %v1524
        %v1613 = vunpack.c.l.b16 %v1525
        %v1614 = vunpack.c.h.b16 %v1524
        %v1615 = vunpack.c.h.b16 %v1525
        %v1616 = vunpack.c.l.b16 %v1526
        %v1617 = vunpack.c.l.b16 %v1527
        %v1618 = vunpack.c.h.b16 %v1526
        %v1619 = vunpack.c.h.b16 %v1527
        %v1620 = vunpack.c.l.b16 %v1528
        %v1621 = vunpack.c.l.b16 %v1529
        %v1622 = vunpack.c.h.b16 %v1528
        %v1623 = vunpack.c.h.b16 %v1529
        %v1624 = vunpack.c.l.b16 %v1530
        %v1625 = vunpack.c.l.b16 %v1531
        %v1626 = vunpack.c.h.b16 %v1530
        %v1627 = vunpack.c.h.b16 %v1531
        %v1628 = vpack.c.b16 %v1565, %v1564
        %v1629 = vpack.c.b16 %v1567, %v1566
        %v1630 = vpack.c.b16 %v1569, %v1568
        %v1631 = vpack.c.b16 %v1571, %v1570
        %v1632 = vpack.c.b16 %v1573, %v1572
        %v1633 = vpack.c.b16 %v1575, %v1574
        %v1634 = vpack.c.b16 %v1577, %v1576
        %v1635 = vpack.c.b16 %v1579, %v1578
        %v1636 = vpack.c.b16 %v1581, %v1580
        %v1637 = vpack.c.b16 %v1583, %v1582
        %v1638 = vpack.c.b16 %v1585, %v1584
        %v1639 = vpack.c.b16 %v1587, %v1586
        %v1640 = vpack.c.b16 %v1589, %v1588
        %v1641 = vpack.c.b16 %v1591, %v1590
        %v1642 = vpack.c.b16 %v1593, %v1592
        %v1643 = vpack.c.b16 %v1595, %v1594
        %v1644 = vpack.c.b16 %v1597, %v1596
        %v1645 = vpack.c.b16 %v1599, %v1598
        %v1646 = vpack.c.b16 %v1601, %v1600
        %v1647 = vpack.c.b16 %v1603, %v1602
        %v1648 = vpack.c.b16 %v1605, %v1604
        %v1649 = vpack.c.b16 %v1607, %v1606
        %v1650 = vpack.c.b16 %v1609, %v1608
        %v1651 = vpack.c.b16 %v1611, %v1610
        %v1652 = vpack.c.b16 %v1613, %v1612
        %v1653 = vpack.c.b16 %v1615, %v1614
        %v1654 = vpack.c.b16 %v1617, %v1616
        %v1655 = vpack.c.b16 %v1619, %v1618
        %v1656 = vpack.c.b16 %v1621, %v1620
        %v1657 = vpack.c.b16 %v1623, %v1622
        %v1658 = vpack.c.b16 %v1625, %v1624
        %v1659 = vpack.c.b16 %v1627, %v1626
        %1692 = vst [vmem:[#allocation16] sm:$0xff] %v1628
        %1693 = vst [vmem:[#allocation16 + $0x8] sm:$0xff] %v1629
        %1694 = vst [vmem:[#allocation16 + $0x10] sm:$0xff] %v1630
        %1695 = vst [vmem:[#allocation16 + $0x18] sm:$0xff] %v1631
        %1696 = vst [vmem:[#allocation16 + $0x20] sm:$0xff] %v1632
        %1697 = vst [vmem:[#allocation16 + $0x28] sm:$0xff] %v1633
        %1698 = vst [vmem:[#allocation16 + $0x30] sm:$0xff] %v1634
        %1699 = vst [vmem:[#allocation16 + $0x38] sm:$0xff] %v1635
        %1700 = vst [vmem:[#allocation16 + $0x40] sm:$0xff] %v1636
        %1701 = vst [vmem:[#allocation16 + $0x48] sm:$0xff] %v1637
        %1702 = vst [vmem:[#allocation16 + $0x50] sm:$0xff] %v1638
        %1703 = vst [vmem:[#allocation16 + $0x58] sm:$0xff] %v1639
        %1704 = vst [vmem:[#allocation16 + $0x60] sm:$0xff] %v1640
        %1705 = vst [vmem:[#allocation16 + $0x68] sm:$0xff] %v1641
        %1706 = vst [vmem:[#allocation16 + $0x70] sm:$0xff] %v1642
        %1707 = vst [vmem:[#allocation16 + $0x78] sm:$0xff] %v1643
        %1708 = vst [vmem:[#allocation16 + $0x80] sm:$0xff] %v1644
        %1709 = vst [vmem:[#allocation16 + $0x88] sm:$0xff] %v1645
        %1710 = vst [vmem:[#allocation16 + $0x90] sm:$0xff] %v1646
        %1711 = vst [vmem:[#allocation16 + $0x98] sm:$0xff] %v1647
        %1712 = vst [vmem:[#allocation16 + $0xa0] sm:$0xff] %v1648
        %1713 = vst [vmem:[#allocation16 + $0xa8] sm:$0xff] %v1649
        %1714 = vst [vmem:[#allocation16 + $0xb0] sm:$0xff] %v1650
        %1715 = vst [vmem:[#allocation16 + $0xb8] sm:$0xff] %v1651
        %1716 = vst [vmem:[#allocation16 + $0xc0] sm:$0xff] %v1652
        %1717 = vst [vmem:[#allocation16 + $0xc8] sm:$0xff] %v1653
        %1718 = vst [vmem:[#allocation16 + $0xd0] sm:$0xff] %v1654
        %1719 = vst [vmem:[#allocation16 + $0xd8] sm:$0xff] %v1655
        %1720 = vst [vmem:[#allocation16 + $0xe0] sm:$0xff] %v1656
        %1721 = vst [vmem:[#allocation16 + $0xe8] sm:$0xff] %v1657
        %1722 = vst [vmem:[#allocation16 + $0xf0] sm:$0xff] %v1658
        %1723 = vst [vmem:[#allocation16 + $0xf8] sm:$0xff] %v1659
        %v1724 = vld [vmem:[#allocation8] sm:$0x3]
        %s1725 = scalar_lea.vmem [#allocation8], 2
        %v1726 = vld [vmem:[%s1725] sm:$0x3]
        %v1727 = vmul.f32 %v1726, 0.999
        %v1728 = vmul.f32 %v1724, 0.001
        %v1729 = vadd.f32 %v1727, %v1728
        %1730 = vst.msk [vmem:[#allocation17] sm:$0x3] %vm1113, %v1729
        %v1731 = vld [vmem:[#allocation10] sm:$0xf]
        %v1732 = vld [vmem:[#allocation10 + $0x4] sm:$0xf]
        %v1733 = vld [vmem:[#allocation10 + $0x8] sm:$0xf]
        %v1734 = vld [vmem:[#allocation10 + $0xc] sm:$0xf]
        %v1735 = vld [vmem:[#allocation10 + $0x10] sm:$0xf]
        %v1736 = vld [vmem:[#allocation10 + $0x14] sm:$0xf]
        %v1737 = vld [vmem:[#allocation10 + $0x18] sm:$0xf]
        %v1738 = vld [vmem:[#allocation10 + $0x1c] sm:$0xf]
        %v1739 = vld [vmem:[#allocation10 + $0x20] sm:$0xf]
        %v1740 = vld [vmem:[#allocation10 + $0x24] sm:$0xf]
        %v1741 = vld [vmem:[#allocation10 + $0x28] sm:$0xf]
        %v1742 = vld [vmem:[#allocation10 + $0x2c] sm:$0xf]
        %v1743 = vld [vmem:[#allocation10 + $0x30] sm:$0xf]
        %v1744 = vld [vmem:[#allocation10 + $0x34] sm:$0xf]
        %v1745 = vld [vmem:[#allocation10 + $0x38] sm:$0xf]
        %v1746 = vld [vmem:[#allocation10 + $0x3c] sm:$0xf]
        %v1747 = vld [vmem:[#allocation10 + $0x40] sm:$0xf]
        %v1748 = vld [vmem:[#allocation10 + $0x44] sm:$0xf]
        %v1749 = vld [vmem:[#allocation10 + $0x48] sm:$0xf]
        %v1750 = vld [vmem:[#allocation10 + $0x4c] sm:$0xf]
        %v1751 = vld [vmem:[#allocation10 + $0x50] sm:$0xf]
        %v1752 = vld [vmem:[#allocation10 + $0x54] sm:$0xf]
        %v1753 = vld [vmem:[#allocation10 + $0x58] sm:$0xf]
        %v1754 = vld [vmem:[#allocation10 + $0x5c] sm:$0xf]
        %v1755 = vld [vmem:[#allocation10 + $0x60] sm:$0xf]
        %v1756 = vld [vmem:[#allocation10 + $0x64] sm:$0xf]
        %v1757 = vld [vmem:[#allocation10 + $0x68] sm:$0xf]
        %v1758 = vld [vmem:[#allocation10 + $0x6c] sm:$0xf]
        %v1759 = vld [vmem:[#allocation10 + $0x70] sm:$0xf]
        %v1760 = vld [vmem:[#allocation10 + $0x74] sm:$0xf]
        %v1761 = vld [vmem:[#allocation10 + $0x78] sm:$0xf]
        %v1762 = vld [vmem:[#allocation10 + $0x7c] sm:$0xf]
        %v1763 = vunpack.c.l.bf16 %v1731
        %v1764 = vunpack.c.l.bf16 %v1732
        %v1765 = vunpack.c.l.bf16 %v1733
        %v1766 = vunpack.c.l.bf16 %v1734
        %v1767 = vunpack.c.l.bf16 %v1735
        %v1768 = vunpack.c.l.bf16 %v1736
        %v1769 = vunpack.c.l.bf16 %v1737
        %v1770 = vunpack.c.l.bf16 %v1738
        %v1771 = vunpack.c.l.bf16 %v1739
        %v1772 = vunpack.c.l.bf16 %v1740
        %v1773 = vunpack.c.l.bf16 %v1741
        %v1774 = vunpack.c.l.bf16 %v1742
        %v1775 = vunpack.c.l.bf16 %v1743
        %v1776 = vunpack.c.l.bf16 %v1744
        %v1777 = vunpack.c.l.bf16 %v1745
        %v1778 = vunpack.c.l.bf16 %v1746
        %v1779 = vunpack.c.l.bf16 %v1747
        %v1780 = vunpack.c.l.bf16 %v1748
        %v1781 = vunpack.c.l.bf16 %v1749
        %v1782 = vunpack.c.l.bf16 %v1750
        %v1783 = vunpack.c.l.bf16 %v1751
        %v1784 = vunpack.c.l.bf16 %v1752
        %v1785 = vunpack.c.l.bf16 %v1753
        %v1786 = vunpack.c.l.bf16 %v1754
        %v1787 = vunpack.c.l.bf16 %v1755
        %v1788 = vunpack.c.l.bf16 %v1756
        %v1789 = vunpack.c.l.bf16 %v1757
        %v1790 = vunpack.c.l.bf16 %v1758
        %v1791 = vunpack.c.l.bf16 %v1759
        %v1792 = vunpack.c.l.bf16 %v1760
        %v1793 = vunpack.c.l.bf16 %v1761
        %v1794 = vunpack.c.l.bf16 %v1762
        %s1795 = scalar_lea.vmem [#allocation10], 128
        %v1796 = vld [vmem:[%s1795] sm:$0xf]
        %v1797 = vld [vmem:[%s1795 + $0x4] sm:$0xf]
        %v1798 = vld [vmem:[%s1795 + $0x8] sm:$0xf]
        %v1799 = vld [vmem:[%s1795 + $0xc] sm:$0xf]
        %v1800 = vld [vmem:[%s1795 + $0x10] sm:$0xf]
        %v1801 = vld [vmem:[%s1795 + $0x14] sm:$0xf]
        %v1802 = vld [vmem:[%s1795 + $0x18] sm:$0xf]
        %v1803 = vld [vmem:[%s1795 + $0x1c] sm:$0xf]
        %v1804 = vld [vmem:[%s1795 + $0x20] sm:$0xf]
        %v1805 = vld [vmem:[%s1795 + $0x24] sm:$0xf]
        %v1806 = vld [vmem:[%s1795 + $0x28] sm:$0xf]
        %v1807 = vld [vmem:[%s1795 + $0x2c] sm:$0xf]
        %v1808 = vld [vmem:[%s1795 + $0x30] sm:$0xf]
        %v1809 = vld [vmem:[%s1795 + $0x34] sm:$0xf]
        %v1810 = vld [vmem:[%s1795 + $0x38] sm:$0xf]
        %v1811 = vld [vmem:[%s1795 + $0x3c] sm:$0xf]
        %v1812 = vld [vmem:[%s1795 + $0x40] sm:$0xf]
        %v1813 = vld [vmem:[%s1795 + $0x44] sm:$0xf]
        %v1814 = vld [vmem:[%s1795 + $0x48] sm:$0xf]
        %v1815 = vld [vmem:[%s1795 + $0x4c] sm:$0xf]
        %v1816 = vld [vmem:[%s1795 + $0x50] sm:$0xf]
        %v1817 = vld [vmem:[%s1795 + $0x54] sm:$0xf]
        %v1818 = vld [vmem:[%s1795 + $0x58] sm:$0xf]
        %v1819 = vld [vmem:[%s1795 + $0x5c] sm:$0xf]
        %v1820 = vld [vmem:[%s1795 + $0x60] sm:$0xf]
        %v1821 = vld [vmem:[%s1795 + $0x64] sm:$0xf]
        %v1822 = vld [vmem:[%s1795 + $0x68] sm:$0xf]
        %v1823 = vld [vmem:[%s1795 + $0x6c] sm:$0xf]
        %v1824 = vld [vmem:[%s1795 + $0x70] sm:$0xf]
        %v1825 = vld [vmem:[%s1795 + $0x74] sm:$0xf]
        %v1826 = vld [vmem:[%s1795 + $0x78] sm:$0xf]
        %v1827 = vld [vmem:[%s1795 + $0x7c] sm:$0xf]
        %v1828 = vunpack.c.l.bf16 %v1796
        %v1829 = vunpack.c.l.bf16 %v1797
        %v1830 = vunpack.c.l.bf16 %v1798
        %v1831 = vunpack.c.l.bf16 %v1799
        %v1832 = vunpack.c.l.bf16 %v1800
        %v1833 = vunpack.c.l.bf16 %v1801
        %v1834 = vunpack.c.l.bf16 %v1802
        %v1835 = vunpack.c.l.bf16 %v1803
        %v1836 = vunpack.c.l.bf16 %v1804
        %v1837 = vunpack.c.l.bf16 %v1805
        %v1838 = vunpack.c.l.bf16 %v1806
        %v1839 = vunpack.c.l.bf16 %v1807
        %v1840 = vunpack.c.l.bf16 %v1808
        %v1841 = vunpack.c.l.bf16 %v1809
        %v1842 = vunpack.c.l.bf16 %v1810
        %v1843 = vunpack.c.l.bf16 %v1811
        %v1844 = vunpack.c.l.bf16 %v1812
        %v1845 = vunpack.c.l.bf16 %v1813
        %v1846 = vunpack.c.l.bf16 %v1814
        %v1847 = vunpack.c.l.bf16 %v1815
        %v1848 = vunpack.c.l.bf16 %v1816
        %v1849 = vunpack.c.l.bf16 %v1817
        %v1850 = vunpack.c.l.bf16 %v1818
        %v1851 = vunpack.c.l.bf16 %v1819
        %v1852 = vunpack.c.l.bf16 %v1820
        %v1853 = vunpack.c.l.bf16 %v1821
        %v1854 = vunpack.c.l.bf16 %v1822
        %v1855 = vunpack.c.l.bf16 %v1823
        %v1856 = vunpack.c.l.bf16 %v1824
        %v1857 = vunpack.c.l.bf16 %v1825
        %v1858 = vunpack.c.l.bf16 %v1826
        %v1859 = vunpack.c.l.bf16 %v1827
        %v1860 = vmul.f32 %v1828, 0.999
        %v1861 = vmul.f32 %v1829, 0.999
        %v1862 = vmul.f32 %v1830, 0.999
        %v1863 = vmul.f32 %v1831, 0.999
        %v1864 = vmul.f32 %v1832, 0.999
        %v1865 = vmul.f32 %v1833, 0.999
        %v1866 = vmul.f32 %v1834, 0.999
        %v1867 = vmul.f32 %v1835, 0.999
        %v1868 = vmul.f32 %v1836, 0.999
        %v1869 = vmul.f32 %v1837, 0.999
        %v1870 = vmul.f32 %v1838, 0.999
        %v1871 = vmul.f32 %v1839, 0.999
        %v1872 = vmul.f32 %v1840, 0.999
        %v1873 = vmul.f32 %v1841, 0.999
        %v1874 = vmul.f32 %v1842, 0.999
        %v1875 = vmul.f32 %v1843, 0.999
        %v1876 = vmul.f32 %v1844, 0.999
        %v1877 = vmul.f32 %v1845, 0.999
        %v1878 = vmul.f32 %v1846, 0.999
        %v1879 = vmul.f32 %v1847, 0.999
        %v1880 = vmul.f32 %v1848, 0.999
        %v1881 = vmul.f32 %v1849, 0.999
        %v1882 = vmul.f32 %v1850, 0.999
        %v1883 = vmul.f32 %v1851, 0.999
        %v1884 = vmul.f32 %v1852, 0.999
        %v1885 = vmul.f32 %v1853, 0.999
        %v1886 = vmul.f32 %v1854, 0.999
        %v1887 = vmul.f32 %v1855, 0.999
        %v1888 = vmul.f32 %v1856, 0.999
        %v1889 = vmul.f32 %v1857, 0.999
        %v1890 = vmul.f32 %v1858, 0.999
        %v1891 = vmul.f32 %v1859, 0.999
        %v1892 = vmul.f32 %v1763, 0.001
        %v1893 = vmul.f32 %v1764, 0.001
        %v1894 = vmul.f32 %v1765, 0.001
        %v1895 = vmul.f32 %v1766, 0.001
        %v1896 = vmul.f32 %v1767, 0.001
        %v1897 = vmul.f32 %v1768, 0.001
        %v1898 = vmul.f32 %v1769, 0.001
        %v1899 = vmul.f32 %v1770, 0.001
        %v1900 = vmul.f32 %v1771, 0.001
        %v1901 = vmul.f32 %v1772, 0.001
        %v1902 = vmul.f32 %v1773, 0.001
        %v1903 = vmul.f32 %v1774, 0.001
        %v1904 = vmul.f32 %v1775, 0.001
        %v1905 = vmul.f32 %v1776, 0.001
        %v1906 = vmul.f32 %v1777, 0.001
        %v1907 = vmul.f32 %v1778, 0.001
        %v1908 = vmul.f32 %v1779, 0.001
        %v1909 = vmul.f32 %v1780, 0.001
        %v1910 = vmul.f32 %v1781, 0.001
        %v1911 = vmul.f32 %v1782, 0.001
        %v1912 = vmul.f32 %v1783, 0.001
        %v1913 = vmul.f32 %v1784, 0.001
        %v1914 = vmul.f32 %v1785, 0.001
        %v1915 = vmul.f32 %v1786, 0.001
        %v1916 = vmul.f32 %v1787, 0.001
        %v1917 = vmul.f32 %v1788, 0.001
        %v1918 = vmul.f32 %v1789, 0.001
        %v1919 = vmul.f32 %v1790, 0.001
        %v1920 = vmul.f32 %v1791, 0.001
        %v1921 = vmul.f32 %v1792, 0.001
        %v1922 = vmul.f32 %v1793, 0.001
        %v1923 = vmul.f32 %v1794, 0.001
        %v1924 = vadd.f32 %v1860, %v1892
        %v1925 = vadd.f32 %v1861, %v1893
        %v1926 = vadd.f32 %v1862, %v1894
        %v1927 = vadd.f32 %v1863, %v1895
        %v1928 = vadd.f32 %v1864, %v1896
        %v1929 = vadd.f32 %v1865, %v1897
        %v1930 = vadd.f32 %v1866, %v1898
        %v1931 = vadd.f32 %v1867, %v1899
        %v1932 = vadd.f32 %v1868, %v1900
        %v1933 = vadd.f32 %v1869, %v1901
        %v1934 = vadd.f32 %v1870, %v1902
        %v1935 = vadd.f32 %v1871, %v1903
        %v1936 = vadd.f32 %v1872, %v1904
        %v1937 = vadd.f32 %v1873, %v1905
        %v1938 = vadd.f32 %v1874, %v1906
        %v1939 = vadd.f32 %v1875, %v1907
        %v1940 = vadd.f32 %v1876, %v1908
        %v1941 = vadd.f32 %v1877, %v1909
        %v1942 = vadd.f32 %v1878, %v1910
        %v1943 = vadd.f32 %v1879, %v1911
        %v1944 = vadd.f32 %v1880, %v1912
        %v1945 = vadd.f32 %v1881, %v1913
        %v1946 = vadd.f32 %v1882, %v1914
        %v1947 = vadd.f32 %v1883, %v1915
        %v1948 = vadd.f32 %v1884, %v1916
        %v1949 = vadd.f32 %v1885, %v1917
        %v1950 = vadd.f32 %v1886, %v1918
        %v1951 = vadd.f32 %v1887, %v1919
        %v1952 = vadd.f32 %v1888, %v1920
        %v1953 = vadd.f32 %v1889, %v1921
        %v1954 = vadd.f32 %v1890, %v1922
        %v1955 = vadd.f32 %v1891, %v1923
        %v1956 = vpack.c.bf16 %v1925, %v1924
        %v1957 = vpack.c.bf16 %v1927, %v1926
        %v1958 = vpack.c.bf16 %v1929, %v1928
        %v1959 = vpack.c.bf16 %v1931, %v1930
        %v1960 = vpack.c.bf16 %v1933, %v1932
        %v1961 = vpack.c.bf16 %v1935, %v1934
        %v1962 = vpack.c.bf16 %v1937, %v1936
        %v1963 = vpack.c.bf16 %v1939, %v1938
        %v1964 = vpack.c.bf16 %v1941, %v1940
        %v1965 = vpack.c.bf16 %v1943, %v1942
        %v1966 = vpack.c.bf16 %v1945, %v1944
        %v1967 = vpack.c.bf16 %v1947, %v1946
        %v1968 = vpack.c.bf16 %v1949, %v1948
        %v1969 = vpack.c.bf16 %v1951, %v1950
        %v1970 = vpack.c.bf16 %v1953, %v1952
        %v1971 = vpack.c.bf16 %v1955, %v1954
        %v1988 = vunpack.c.l.b16 %v1956
        %v1989 = vunpack.c.h.b16 %v1956
        %v1990 = vunpack.c.l.b16 %v1957
        %v1991 = vunpack.c.h.b16 %v1957
        %v1992 = vunpack.c.l.b16 %v1958
        %v1993 = vunpack.c.h.b16 %v1958
        %v1994 = vunpack.c.l.b16 %v1959
        %v1995 = vunpack.c.h.b16 %v1959
        %v1996 = vunpack.c.l.b16 %v1960
        %v1997 = vunpack.c.h.b16 %v1960
        %v1998 = vunpack.c.l.b16 %v1961
        %v1999 = vunpack.c.h.b16 %v1961
        %v2000 = vunpack.c.l.b16 %v1962
        %v2001 = vunpack.c.h.b16 %v1962
        %v2002 = vunpack.c.l.b16 %v1963
        %v2003 = vunpack.c.h.b16 %v1963
        %v2004 = vunpack.c.l.b16 %v1964
        %v2005 = vunpack.c.h.b16 %v1964
        %v2006 = vunpack.c.l.b16 %v1965
        %v2007 = vunpack.c.h.b16 %v1965
        %v2008 = vunpack.c.l.b16 %v1966
        %v2009 = vunpack.c.h.b16 %v1966
        %v2010 = vunpack.c.l.b16 %v1967
        %v2011 = vunpack.c.h.b16 %v1967
        %v2012 = vunpack.c.l.b16 %v1968
        %v2013 = vunpack.c.h.b16 %v1968
        %v2014 = vunpack.c.l.b16 %v1969
        %v2015 = vunpack.c.h.b16 %v1969
        %v2016 = vunpack.c.l.b16 %v1970
        %v2017 = vunpack.c.h.b16 %v1970
        %v2018 = vunpack.c.l.b16 %v1971
        %v2019 = vunpack.c.h.b16 %v1971
        %v2020 = vpack.c.b16 %v1988, %v1988
        %v2021 = vpack.c.b16 %v1989, %v1989
        %v2022 = vpack.c.b16 %v1990, %v1990
        %v2023 = vpack.c.b16 %v1991, %v1991
        %v2024 = vpack.c.b16 %v1992, %v1992
        %v2025 = vpack.c.b16 %v1993, %v1993
        %v2026 = vpack.c.b16 %v1994, %v1994
        %v2027 = vpack.c.b16 %v1995, %v1995
        %v2028 = vpack.c.b16 %v1996, %v1996
        %v2029 = vpack.c.b16 %v1997, %v1997
        %v2030 = vpack.c.b16 %v1998, %v1998
        %v2031 = vpack.c.b16 %v1999, %v1999
        %v2032 = vpack.c.b16 %v2000, %v2000
        %v2033 = vpack.c.b16 %v2001, %v2001
        %v2034 = vpack.c.b16 %v2002, %v2002
        %v2035 = vpack.c.b16 %v2003, %v2003
        %v2036 = vpack.c.b16 %v2004, %v2004
        %v2037 = vpack.c.b16 %v2005, %v2005
        %v2038 = vpack.c.b16 %v2006, %v2006
        %v2039 = vpack.c.b16 %v2007, %v2007
        %v2040 = vpack.c.b16 %v2008, %v2008
        %v2041 = vpack.c.b16 %v2009, %v2009
        %v2042 = vpack.c.b16 %v2010, %v2010
        %v2043 = vpack.c.b16 %v2011, %v2011
        %v2044 = vpack.c.b16 %v2012, %v2012
        %v2045 = vpack.c.b16 %v2013, %v2013
        %v2046 = vpack.c.b16 %v2014, %v2014
        %v2047 = vpack.c.b16 %v2015, %v2015
        %v2048 = vpack.c.b16 %v2016, %v2016
        %v2049 = vpack.c.b16 %v2017, %v2017
        %v2050 = vpack.c.b16 %v2018, %v2018
        %v2051 = vpack.c.b16 %v2019, %v2019
        %2084 = vst [vmem:[#allocation19] sm:$0xf] %v2020
        %2085 = vst [vmem:[#allocation19 + $0x4] sm:$0xf] %v2021
        %2086 = vst [vmem:[#allocation19 + $0x8] sm:$0xf] %v2022
        %2087 = vst [vmem:[#allocation19 + $0xc] sm:$0xf] %v2023
        %2088 = vst [vmem:[#allocation19 + $0x10] sm:$0xf] %v2024
        %2089 = vst [vmem:[#allocation19 + $0x14] sm:$0xf] %v2025
        %2090 = vst [vmem:[#allocation19 + $0x18] sm:$0xf] %v2026
        %2091 = vst [vmem:[#allocation19 + $0x1c] sm:$0xf] %v2027
        %2092 = vst [vmem:[#allocation19 + $0x20] sm:$0xf] %v2028
        %2093 = vst [vmem:[#allocation19 + $0x24] sm:$0xf] %v2029
        %2094 = vst [vmem:[#allocation19 + $0x28] sm:$0xf] %v2030
        %2095 = vst [vmem:[#allocation19 + $0x2c] sm:$0xf] %v2031
        %2096 = vst [vmem:[#allocation19 + $0x30] sm:$0xf] %v2032
        %2097 = vst [vmem:[#allocation19 + $0x34] sm:$0xf] %v2033
        %2098 = vst [vmem:[#allocation19 + $0x38] sm:$0xf] %v2034
        %2099 = vst [vmem:[#allocation19 + $0x3c] sm:$0xf] %v2035
        %2100 = vst [vmem:[#allocation19 + $0x40] sm:$0xf] %v2036
        %2101 = vst [vmem:[#allocation19 + $0x44] sm:$0xf] %v2037
        %2102 = vst [vmem:[#allocation19 + $0x48] sm:$0xf] %v2038
        %2103 = vst [vmem:[#allocation19 + $0x4c] sm:$0xf] %v2039
        %2104 = vst [vmem:[#allocation19 + $0x50] sm:$0xf] %v2040
        %2105 = vst [vmem:[#allocation19 + $0x54] sm:$0xf] %v2041
        %2106 = vst [vmem:[#allocation19 + $0x58] sm:$0xf] %v2042
        %2107 = vst [vmem:[#allocation19 + $0x5c] sm:$0xf] %v2043
        %2108 = vst [vmem:[#allocation19 + $0x60] sm:$0xf] %v2044
        %2109 = vst [vmem:[#allocation19 + $0x64] sm:$0xf] %v2045
        %2110 = vst [vmem:[#allocation19 + $0x68] sm:$0xf] %v2046
        %2111 = vst [vmem:[#allocation19 + $0x6c] sm:$0xf] %v2047
        %2112 = vst [vmem:[#allocation19 + $0x70] sm:$0xf] %v2048
        %2113 = vst [vmem:[#allocation19 + $0x74] sm:$0xf] %v2049
        %2114 = vst [vmem:[#allocation19 + $0x78] sm:$0xf] %v2050
        %2115 = vst [vmem:[#allocation19 + $0x7c] sm:$0xf] %v2051
        %v2116 = vld [vmem:[#allocation11] sm:$0x1]
        %s2117 = scalar_lea.vmem [#allocation11], 1
        %v2118 = vld [vmem:[%s2117] sm:$0x1]
        %v2119 = vmul.f32 %v2118, 0.999
        %v2120 = vmul.f32 %v2116, 0.001
        %v2121 = vadd.f32 %v2119, %v2120
        %2122 = vst [vmem:[#allocation20] sm:$0x1] %v2121
        %s2123 = sand.u32 %s174, 1
        %s2124 = scalar_lea.sflag [#allocation4], %s2123
        %s2125 = sand.u32 %s174, 1
        %s2126 = smul.addr %s2125, 256
        %s2127 = scalar_lea.vmem [#allocation13], %s2126
        // Predicated region
        $region69: #{tpu_custom_call.1} parent=43 // pred_check
          %p2128 = pneg %p184
        $region70: #{tpu_custom_call.1} parent=43 // pred_check_branch
          %2130 = sbr.rel (%p2128) target = $region72
        $region71: #{tpu_custom_call.1} parent=43 // pred_region
          %s2131 = smul.u32 32, %s35
          %s2133 = ssub.s32 4096, 4096
          %2134 = vsyncadd %s2124, %s2133
          %s2135 = smul.addr %s2131, 2
          %s2136 = sadd.s32 %s2135, 192
          %s2137 = smul.addr %s2136, 64
          %s2138 = scalar_lea.hbm %s6, %s2137
          %s2139 = sshll.u32 %s2127, 4
          %s2140 = int_to_ptr.vmem [resolvable:$true] %s2139
          %2145 = dma.vmem_to_hbm [thread:$0]  %s2140, 4096, %s2138, %s2124, 128, 128, 8
        $region72: #{tpu_custom_call.1} parent=43 // pred_fallthru
          _
        // Predicated region
        $region73: #{tpu_custom_call.1} parent=43 // pred_check
          %p2146 = pneg %p205
        $region74: #{tpu_custom_call.1} parent=43 // pred_check_branch
          %2148 = sbr.rel (%p2146) target = $region76
        $region75: #{tpu_custom_call.1} parent=43 // pred_region
          %s2150 = ssub.s32 32, 32
          %2151 = vsyncadd [#allocation15], %s2150
          %s2152 = scalar_lea.hbm %s7, 32
          %s2154 = sshll.u32 [#allocation14], 4
          %s2155 = int_to_ptr.vmem [resolvable:$true] %s2154
          %2157 = dma.vmem_to_hbm [thread:$0]  %s2155, 32, %s2152, [#allocation15]
        $region76: #{tpu_custom_call.1} parent=43 // pred_fallthru
          _
        // Predicated region
        $region77: #{tpu_custom_call.1} parent=43 // pred_check
          %p2158 = pneg %p226
        $region78: #{tpu_custom_call.1} parent=43 // pred_check_branch
          %2160 = sbr.rel (%p2158) target = $region80
        $region79: #{tpu_custom_call.1} parent=43 // pred_region
          %s2162 = ssub.s32 4096, 4096
          %2163 = vsyncadd [#allocation15], %s2162
          %s2164 = scalar_lea.hbm %s8, 4096
          %s2165 = sshll.u32 [#allocation16], 4
          %s2166 = int_to_ptr.vmem [resolvable:$true] %s2165
          %2171 = dma.vmem_to_hbm [thread:$0]  %s2166, 4096, %s2164, [#allocation15], 128, 128, 8
        $region80: #{tpu_custom_call.1} parent=43 // pred_fallthru
          _
        // Predicated region
        $region81: #{tpu_custom_call.1} parent=43 // pred_check
          %p2172 = pneg %p247
        $region82: #{tpu_custom_call.1} parent=43 // pred_check_branch
          %2174 = sbr.rel (%p2172) target = $region84
        $region83: #{tpu_custom_call.1} parent=43 // pred_region
          %s2176 = ssub.s32 32, 32
          %2177 = vsyncadd [#allocation18], %s2176
          %s2178 = scalar_lea.hbm %s9, 32
          %s2180 = sshll.u32 [#allocation17], 4
          %s2181 = int_to_ptr.vmem [resolvable:$true] %s2180
          %2183 = dma.vmem_to_hbm [thread:$0]  %s2181, 32, %s2178, [#allocation18]
        $region84: #{tpu_custom_call.1} parent=43 // pred_fallthru
          _
        // Predicated region
        $region85: #{tpu_custom_call.1} parent=43 // pred_check
          %p2184 = pneg %p268
        $region86: #{tpu_custom_call.1} parent=43 // pred_check_branch
          %2186 = sbr.rel (%p2184) target = $region88
        $region87: #{tpu_custom_call.1} parent=43 // pred_region
          %s2188 = ssub.s32 2048, 2048
          %2189 = vsyncadd [#allocation18], %s2188
          %s2190 = scalar_lea.hbm %s10, 2048
          %s2191 = sshll.u32 [#allocation19], 4
          %s2192 = int_to_ptr.vmem [resolvable:$true] %s2191
          %2197 = dma.vmem_to_hbm [thread:$0]  %s2192, 2048, %s2190, [#allocation18], 64, 64, 4
        $region88: #{tpu_custom_call.1} parent=43 // pred_fallthru
          _
        // Predicated region
        $region89: #{tpu_custom_call.1} parent=43 // pred_check
          %p2198 = pneg %p289
        $region90: #{tpu_custom_call.1} parent=43 // pred_check_branch
          %2200 = sbr.rel (%p2198) target = $region92
        $region91: #{tpu_custom_call.1} parent=43 // pred_region
          %s2202 = ssub.s32 16, 16
          %2203 = vsyncadd [#allocation21], %s2202
          %s2204 = scalar_lea.hbm %s11, 16
          %s2206 = sshll.u32 [#allocation20], 4
          %s2207 = int_to_ptr.vmem [resolvable:$true] %s2206
          %2209 = dma.vmem_to_hbm [thread:$0]  %s2207, 16, %s2204, [#allocation21]
        $region92: #{tpu_custom_call.1} parent=43 // pred_fallthru
          _
        // Predicated region
        $region93: #{tpu_custom_call.1} parent=43 // pred_check
          %p2210 = pneg %p205
        $region94: #{tpu_custom_call.1} parent=43 // pred_check_branch
          %2212 = sbr.rel (%p2210) target = $region96
        $region95: #{tpu_custom_call.1} parent=43 // pred_region
          %2213 = dma.done [#allocation15], 32
        $region96: #{tpu_custom_call.1} parent=43 // pred_fallthru
          _
        // Predicated region
        $region97: #{tpu_custom_call.1} parent=43 // pred_check
          %p2214 = pneg %p226
        $region98: #{tpu_custom_call.1} parent=43 // pred_check_branch
          %2216 = sbr.rel (%p2214) target = $region100
        $region99: #{tpu_custom_call.1} parent=43 // pred_region
          %2217 = dma.done [#allocation15], 4096
        $region100: #{tpu_custom_call.1} parent=43 // pred_fallthru
          _
        // Predicated region
        $region101: #{tpu_custom_call.1} parent=43 // pred_check
          %p2218 = pneg %p247
        $region102: #{tpu_custom_call.1} parent=43 // pred_check_branch
          %2220 = sbr.rel (%p2218) target = $region104
        $region103: #{tpu_custom_call.1} parent=43 // pred_region
          %2221 = dma.done [#allocation18], 32
        $region104: #{tpu_custom_call.1} parent=43 // pred_fallthru
          _
        // Predicated region
        $region105: #{tpu_custom_call.1} parent=43 // pred_check
          %p2222 = pneg %p268
        $region106: #{tpu_custom_call.1} parent=43 // pred_check_branch
          %2224 = sbr.rel (%p2222) target = $region108
        $region107: #{tpu_custom_call.1} parent=43 // pred_region
          %2225 = dma.done [#allocation18], 2048
        $region108: #{tpu_custom_call.1} parent=43 // pred_fallthru
          _
        // Predicated region
        $region109: #{tpu_custom_call.1} parent=43 // pred_check
          %p2226 = pneg %p289
        $region110: #{tpu_custom_call.1} parent=43 // pred_check_branch
          %2228 = sbr.rel (%p2226) target = $region112
        $region111: #{tpu_custom_call.1} parent=43 // pred_region
          %2229 = dma.done [#allocation21], 16
        $region112: #{tpu_custom_call.1} parent=43 // pred_fallthru
          _
      $region44: #{tpu_custom_call.1} parent=5 // pred_fallthru
        _
      %p2230 = scmp.le.s32.totalorder 2, %s30
      // Predicated region
      $region113: #{tpu_custom_call.1} parent=5 // pred_check
        %p2231 = pneg %p2230
      $region114: #{tpu_custom_call.1} parent=5 // pred_check_branch
        %2233 = sbr.rel (%p2231) target = $region116
      $region115: #{tpu_custom_call.1} parent=5 // pred_region
        %s2234 = ssub.s32 %s30, 2
        // Predicated region
        $region117: #{tpu_custom_call.1} parent=115 // pred_check
          %p2235 = pneg %p190
        $region118: #{tpu_custom_call.1} parent=115 // pred_check_branch
          %2237 = sbr.rel (%p2235) target = $region120
        $region119: #{tpu_custom_call.1} parent=115 // pred_region
          %s2238 = sand.u32 %s175, 1
          %s2239 = scalar_lea.sflag [#allocation4], %s2238
          %s2240 = sand.u32 %s175, 1
          %s2241 = smul.addr %s2240, 256
          %s2242 = scalar_lea.vmem [#allocation13], %s2241
          %2243 = dma.done %s2239, 4096
        $region120: #{tpu_custom_call.1} parent=115 // pred_fallthru
          _
      $region116: #{tpu_custom_call.1} parent=5 // pred_fallthru
        _
    $region6: #{tpu_custom_call.1} parent=1 // loop_footer
      %s34 = sadd.s32 1, %s30
    $region7: #{tpu_custom_call.1} parent=1 // loop_footer_branch
      %29 = sbr.rel target = $region3
    $region8: #{tpu_custom_call.1} parent=1 // loop_exit
      _
    %2244 = vsyncpa [#allocation3], 1
    %s2245 = scalar_lea.sflag [#allocation3], 1
    %2246 = vsyncpa %s2245, 1
    %2247 = vsyncpa [#allocation6], 1
    %2248 = vsyncpa [#allocation9], 1
    %2249 = vsyncpa [#allocation12], 1
    %2250 = vsyncpa [#allocation4], 1
    %s2251 = scalar_lea.sflag [#allocation4], 1
    %2252 = vsyncpa %s2251, 1
    %2253 = vsyncpa [#allocation15], 1
    %2254 = vsyncpa [#allocation18], 1
    %2255 = vsyncpa [#allocation21], 1

</llo_original>
